<compile_context>
chip_gen: v7x
topology: tpu7x:2x2x1
jax: 0.10.0
libtpu: 0.0.40
codegen_flags: <defaults>
</compile_context>

<pallas_src>
import functools

import jax
import jax.numpy as jnp
from jax.experimental import pallas as pl
from jax.experimental.pallas import tpu as pltpu

DIMS = (8, 64, 128, 256)   # matryoshka dims; base_dim (hidden) = 256 here
_MLP_HIDDEN = 128          # the module's Linear(base_dim, 128) hidden width for dims < 128
_PROJ_LANES = 2 * _MLP_HIDDEN   # packed output: [0:128)=out8|out64|pad, [128:256)=out128, [256:)=base


def _matryoshka_kernel(h_ref, w1_ref, b1_ref, w2_ref, b2_ref, out_ref, *, inv_seq_len):
    """Grid = (batch tiles, seq tiles).

    The packed f32 output block (tb, 256+H) is resident across the seq axis; its
    base-embedding lanes [256:] double as the f32 sequence-sum accumulator, so no
    extra VMEM scratch (and no final copy) is needed.  Projections + stores run
    only on the last sequence step.
    """
    s = pl.program_id(1)

    @pl.when(s == 0)
    def _init():
        out_ref[...] = jnp.zeros_like(out_ref)

    # Streamed mean-pool: the (tb, ts, H) activation tile arrives in its native
    # dtype (bf16 on the wire when the backbone emits bf16) and is upcast here;
    # accumulation is always f32, directly into the resident output slab.
    out_ref[:, _PROJ_LANES:] += jnp.sum(h_ref[...].astype(jnp.float32), axis=1)

    @pl.when(s == pl.num_programs(1) - 1)
    def _finalize():
        # NOTE: the PyTorch module does an UNMASKED mean over the sequence axis
        # (last_hidden_state.mean(dim=1)), so dividing by the full S is the
        # faithful translation (not an attention-mask-weighted mean).
        base = out_ref[:, _PROJ_LANES:] * inv_seq_len      # (tb, H) f32 mean
        out_ref[:, _PROJ_LANES:] = base
        base_bf16 = base.astype(jnp.bfloat16)

        # Fused first layer: [ Linear128 | MLP8.fc1 | MLP64.fc1 ] -> (tb, 384)
        first = (jnp.dot(base_bf16, w1_ref[...],
                         preferred_element_type=jnp.float32)
                 + b1_ref[...])

        # Fused second layer: block-diag [MLP8.fc2 ; MLP64.fc2], zero-padded to 128 lanes.
        hid = jnp.maximum(first[:, 128:384], 0.0).astype(jnp.bfloat16)      # (tb, 256)
        second = (jnp.dot(hid, w2_ref[...],
                          preferred_element_type=jnp.float32)
                  + b2_ref[...])                                            # (tb, 128)

        # Lane-dense packed output: [ out8 | out64 | pad ][ out128 ][ base (H) ]
        out_ref[:, 0:128] = second
        out_ref[:, 128:256] = first[:, 0:128]


def _vmem_capacity_bytes():
    try:
        return int(pltpu.get_tpu_info().vmem_capacity_bytes)
    except Exception:
        return 64 << 20   # conservative default (v7x per-TensorCore VMEM)


def _pick_batch_tile(B, cap=512):
    """Largest multiple-of-8 divisor of B that is <= min(cap, B//2).

    Guarantees >= 2 steps on the 'parallel' batch grid axis whenever B >= 16 so
    v7x's second TensorCore gets work; falls back to the full B for tiny batches
    (a no-op on single-TC v5e/v6e).
    """
    if B < 16:
        return B
    tb = min(cap, (B // 2) // 8 * 8)
    while tb >= 8 and B % tb:
        tb -= 8
    return tb if tb >= 8 else B


def _largest_seq_tile(S, cap):
    """Largest multiple-of-8 divisor of S that is <= cap (else the full S)."""
    if S <= cap:
        return S
    t = (min(cap, S) // 8) * 8
    while t >= 8:
        if S % t == 0:
            return t
        t -= 8
    # NOTE: no multiple-of-8 divisor fits the budget (prime-ish S); taking the
    # full extent may exceed the per-buffer VMEM budget — pad S upstream instead.
    return S


def prepare_params(params):
    """One-time fusion of the projection weights (hoisted out of the per-call forward).

    [ Linear128 | MLP8.fc1 | MLP64.fc1 ] all consume the same input -> one (H, 384)
    bf16 matrix; the two MLP second layers become one block-diagonal (256, 128)
    bf16 matrix (zero-padded lanes). Biases stay f32.
    """
    w1 = jnp.concatenate(
        [params["w128"], params["w1_8"], params["w1_64"]], axis=1
    ).astype(jnp.bfloat16)                                           # (H, 384)
    b1 = jnp.concatenate(
        [params["b128"], params["b1_8"], params["b1_64"]], axis=1
    ).astype(jnp.float32)                                            # (1, 384)

    zc = lambda r, c: jnp.zeros((r, c), jnp.float32)
    w2 = jnp.concatenate(
        [jnp.concatenate([params["w2_8"], zc(_MLP_HIDDEN, 64), zc(_MLP_HIDDEN, 56)], axis=1),
         jnp.concatenate([zc(_MLP_HIDDEN, 8), params["w2_64"], zc(_MLP_HIDDEN, 56)], axis=1)],
        axis=0,
    ).astype(jnp.bfloat16)                                           # (256, 128) block-diag
    b2 = jnp.concatenate(
        [params["b2_8"], params["b2_64"], zc(1, 56)], axis=1
    ).astype(jnp.float32)                                            # (1, 128)
    return {"w1": w1, "b1": b1, "w2": w2, "b2": b2}


@functools.partial(jax.jit, static_argnames=("seq_tile",))
def matryoshka_forward(last_hidden_state, fused, seq_tile=None):
    """Matryoshka head: unmasked mean over seq + projections to dims (8, 64, 128, base).

    `last_hidden_state` may be bf16 (preferred — halves HBM traffic of this
    bandwidth-bound kernel) or f32; accumulation is always f32.
    Returns {'8': (B,8), '64': (B,64), '128': (B,128), '256': (B,H)}.
    """
    B, S, H = last_hidden_state.shape
    assert H % 128 == 0, "base_dim must be a multiple of 128 lanes"
    itemsize = jnp.dtype(last_hidden_state.dtype).itemsize
    w1, b1, w2, b2 = fused["w1"], fused["b1"], fused["w2"], fused["b2"]
    packed_width = _PROJ_LANES + H          # [8|64|pad] ++ [128] ++ [base]

    # --- generation-aware tiling & honest VMEM accounting ---------------------
    vmem_cap = _vmem_capacity_bytes()
    # Scoped limit: ~48 MiB on v7x (64 MiB physical / TC), 64 MiB on v5e/v6e (128 MiB).
    vmem_limit = (48 << 20) if vmem_cap <= (64 << 20) else (64 << 20)

    tb = _pick_batch_tile(B)

    # Constant-index weight specs never change block index; at large H drop their
    # (pure-waste) double buffers with pl.Buffered(1). Negligible at H=256, several
    # MiB of headroom inside v7x's budget at H >= 2K.
    single_buffer_weights = H >= 1024
    weight_copies = 1 if single_buffer_weights else 2

    # Resident bytes: weights/biases + double-buffered packed f32 output block.
    weight_bytes = weight_copies * ((w1.size + w2.size) * 2 + (b1.size + b2.size) * 4)
    out_bytes = 2 * tb * packed_width * 4
    headroom = 4 << 20
    act_budget = max(1 << 20, (vmem_limit - weight_bytes - out_bytes - headroom) // 2)

    if seq_tile is None:
        # Largest seq tile the per-buffer budget allows — keeps each grid step well
        # above the ~4 MiB floor (so the ~0.35 us per-step overhead stays <5%)
        # whenever the budget permits.
        ts = _largest_seq_tile(S, max(8, act_budget // (tb * H * itemsize)))
    else:
        assert S % seq_tile == 0 and (seq_tile % 8 == 0 or seq_tile == S)
        ts = seq_tile

    const = lambda b, s: (0, 0)     # weights resident across all grid steps

    def _wspec(shape):
        if single_buffer_weights:
            return pl.BlockSpec(shape, const, pipeline_mode=pl.Buffered(1))
        return pl.BlockSpec(shape, const)

    packed = pl.pallas_call(
        functools.partial(_matryoshka_kernel, inv_seq_len=1.0 / S),
        out_shape=jax.ShapeDtypeStruct((B, packed_width), jnp.float32),
        grid_spec=pltpu.PrefetchScalarGridSpec(
            num_scalar_prefetch=0,
            grid=(B // tb, S // ts),
            in_specs=[
                pl.BlockSpec((tb, ts, H), lambda b, s: (b, s, 0)),   # streamed activation
                _wspec((H, 3 * _MLP_HIDDEN)),
                _wspec((1, 3 * _MLP_HIDDEN)),
                _wspec((2 * _MLP_HIDDEN, _MLP_HIDDEN)),
                _wspec((1, _MLP_HIDDEN)),
            ],
            out_specs=pl.BlockSpec((tb, packed_width), lambda b, s: (b, 0)),
        ),
        compiler_params=pltpu.CompilerParams(
            dimension_semantics=("parallel", "arbitrary"),
            vmem_limit_bytes=vmem_limit,
        ),
    )(last_hidden_state, w1, b1, w2, b2)

    # Unpack the lane-dense slab into the module's output dict (free layout plumbing).
    return {
        "8": packed[:, 0:8],
        "64": packed[:, 8:72],
        "128": packed[:, 128:256],
        "256": packed[:, _PROJ_LANES:_PROJ_LANES + H],
    }


def init_params(key, base_dim):
    """Deterministic synthetic weights matching the PyTorch module's shapes."""
    ks = jax.random.split(key, 10)
    scale = 0.02

    def w(k, shape):
        return jax.random.normal(k, shape, jnp.float32) * scale

    return {
        # projections['128'] : nn.Linear(base_dim, 128)
        "w128": w(ks[0], (base_dim, 128)),
        "b128": w(ks[1], (1, 128)),
        # projections['8'] : Linear(base_dim,128) -> ReLU -> Linear(128, 8)
        "w1_8": w(ks[2], (base_dim, 128)),
        "b1_8": w(ks[3], (1, 128)),
        "w2_8": w(ks[4], (128, 8)),
        "b2_8": w(ks[5], (1, 8)),
        # projections['64'] : Linear(base_dim,128) -> ReLU -> Linear(128, 64)
        "w1_64": w(ks[6], (base_dim, 128)),
        "b1_64": w(ks[7], (1, 128)),
        "w2_64": w(ks[8], (128, 64)),
        "b2_64": w(ks[9], (1, 64)),
        # projections['256'] : Identity (no params)
    }


def reference_forward(last_hidden_state, params):
    """Plain-JAX f32 reference with the original module's semantics."""
    x = last_hidden_state.astype(jnp.float32)
    base = jnp.mean(x, axis=1)
    o128 = base @ params["w128"] + params["b128"]
    o8 = (jnp.maximum(base @ params["w1_8"] + params["b1_8"], 0.0)
          @ params["w2_8"] + params["b2_8"])
    o64 = (jnp.maximum(base @ params["w1_64"] + params["b1_64"], 0.0)
           @ params["w2_64"] + params["b2_64"])
    return {"8": o8, "64": o64, "128": o128, "256": base}


if __name__ == "__main__":
    # Small shapes consistent with the module: hidden = base_dim = 256 (so the
    # '256' head is Identity), S = 256 matches the wrapper's max_length, and
    # B = 16 gives the 'parallel' batch grid axis 2 steps (v7x dual-TC path).
    B, S, H, V = 16, 256, 256, 1000
    key = jax.random.PRNGKey(0)
    k_ids, k_emb, k_params = jax.random.split(key, 3)

    # Inputs the PyTorch forward takes.
    input_ids = jax.random.randint(k_ids, (B, S), 0, V, dtype=jnp.int32)
    attention_mask = jnp.ones((B, S), dtype=jnp.int32)

    # TODO(synk): the PEFT transformer backbone has no clean Pallas equivalent;
    # stand-in deterministic encoder: bf16 token-embedding lookup masked by
    # attention_mask (bf16 is what a real backbone natively emits, halving HBM
    # traffic into the bandwidth-bound kernel).
    embed_table = (jax.random.normal(k_emb, (V, H), jnp.float32) * 0.1).astype(jnp.bfloat16)
    last_hidden_state = embed_table[input_ids] * attention_mask[..., None].astype(jnp.bfloat16)

    params = init_params(k_params, base_dim=H)
    fused = prepare_params(params)      # one-time weight fusion, hoisted out of the forward
    ref = reference_forward(last_hidden_state, params)

    # seq_tile=None -> production path (largest seq tile the VMEM budget allows);
    # seq_tile=64   -> correctness-only exercise of the streamed multi-step reduction.
    for seq_tile in (None, 64):
        outs = jax.block_until_ready(
            matryoshka_forward(last_hidden_state, fused, seq_tile=seq_tile))
        for d in ("8", "64", "128", "256"):
            assert outs[d].shape == ref[d].shape, (d, outs[d].shape, ref[d].shape)
            assert jnp.allclose(outs[d], ref[d], atol=2e-3, rtol=2e-2), \
                f"mismatch at dim {d} (seq_tile={seq_tile})"

    print("KERNEL_OK")
</pallas_src>

<mosaic_0001>
module attributes {stable_mosaic.version = 11 : i64} {
  func.func @_matryoshka_kernel(%arg0: i32, %arg1: i32, %arg2: memref<8x256x256xbf16, #tpu.memory_space<vmem>>, %arg3: memref<256x384xbf16, #tpu.memory_space<vmem>>, %arg4: memref<1x384xf32, #tpu.memory_space<vmem>>, %arg5: memref<256x128xbf16, #tpu.memory_space<vmem>>, %arg6: memref<1x128xf32, #tpu.memory_space<vmem>>, %arg7: memref<8x512xf32, #tpu.memory_space<vmem>>) attributes {dimension_semantics = [#tpu.dimension_semantics<parallel>, #tpu.dimension_semantics<arbitrary>], iteration_bounds = array<i64: 2, 1>, scalar_prefetch = 0 : i64, scratch_operands = 0 : i64, tpu.core_type = #tpu.core_type<tc>, window_params = [{transform_indices = @transform_0, window_bounds = array<i64: 8, 256, 256>}, {pipeline_mode = #tpu.pipeline_mode<synchronous>, transform_indices = @transform_1, window_bounds = array<i64: 256, 384>}, {pipeline_mode = #tpu.pipeline_mode<synchronous>, transform_indices = @transform_2, window_bounds = array<i64: 1, 384>}, {pipeline_mode = #tpu.pipeline_mode<synchronous>, transform_indices = @transform_3, window_bounds = array<i64: 256, 128>}, {pipeline_mode = #tpu.pipeline_mode<synchronous>, transform_indices = @transform_4, window_bounds = array<i64: 1, 128>}, {transform_indices = @transform_5, window_bounds = array<i64: 8, 512>}]} {
    %c0_i32 = arith.constant 0 : i32
    %0 = arith.cmpi eq, %arg1, %c0_i32 : i32
    %1 = arith.extui %0 : i1 to i32
    %c0_i32_0 = arith.constant 0 : i32
    %2 = arith.cmpi ne, %1, %c0_i32_0 : i32
    scf.if %2 {
      %cst_8 = arith.constant 0.000000e+00 : f32
      %12 = vector.broadcast %cst_8 : f32 to vector<8x512xf32>
      %c0_9 = arith.constant 0 : index
      %c0_10 = arith.constant 0 : index
      %13 = vector.load %arg7[%c0_9, %c0_10] : memref<8x512xf32, #tpu.memory_space<vmem>>, vector<8x512xf32>
      tpu.vector_store %arg7[%c0_9, %c0_10], %12 {strides = array<i32>} : memref<8x512xf32, #tpu.memory_space<vmem>>, vector<8x512xf32>,
    } else {
    }
    %c0 = arith.constant 0 : index
    %c256 = arith.constant 256 : index
    %3 = vector.load %arg7[%c0, %c256] : memref<8x512xf32, #tpu.memory_space<vmem>>, vector<8x256xf32>
    %c0_1 = arith.constant 0 : index
    %c0_2 = arith.constant 0 : index
    %c0_3 = arith.constant 0 : index
    %4 = vector.load %arg2[%c0_1, %c0_2, %c0_3] : memref<8x256x256xbf16, #tpu.memory_space<vmem>>, vector<8x256x256xbf16>
    %5 = arith.extf %4 : vector<8x256x256xbf16> to vector<8x256x256xf32>
    %cst = arith.constant dense<0.000000e+00> : vector<8x256xf32>
    %6 = vector.multi_reduction <add>, %5, %cst [1] : vector<8x256x256xf32> to vector<8x256xf32>
    %7 = arith.addf %3, %6 : vector<8x256xf32>
    %c0_4 = arith.constant 0 : index
    %c256_5 = arith.constant 256 : index
    %8 = vector.load %arg7[%c0_4, %c256_5] : memref<8x512xf32, #tpu.memory_space<vmem>>, vector<8x256xf32>
    tpu.vector_store %arg7[%c0_4, %c256_5], %7 {strides = array<i32>} : memref<8x512xf32, #tpu.memory_space<vmem>>, vector<8x256xf32>,
    %c0_i32_6 = arith.constant 0 : i32
    %9 = arith.cmpi eq, %arg1, %c0_i32_6 : i32
    %10 = arith.extui %9 : i1 to i32
    %c0_i32_7 = arith.constant 0 : i32
    %11 = arith.cmpi ne, %10, %c0_i32_7 : i32
    scf.if %11 {
      %c0_8 = arith.constant 0 : index
      %c256_9 = arith.constant 256 : index
      %12 = vector.load %arg7[%c0_8, %c256_9] : memref<8x512xf32, #tpu.memory_space<vmem>>, vector<8x256xf32>
      %cst_10 = arith.constant 3.906250e-03 : f32
      %13 = vector.broadcast %cst_10 : f32 to vector<8x256xf32>
      %14 = arith.mulf %12, %13 : vector<8x256xf32>
      %c0_11 = arith.constant 0 : index
      %c256_12 = arith.constant 256 : index
      %15 = vector.load %arg7[%c0_11, %c256_12] : memref<8x512xf32, #tpu.memory_space<vmem>>, vector<8x256xf32>
      tpu.vector_store %arg7[%c0_11, %c256_12], %14 {strides = array<i32>} : memref<8x512xf32, #tpu.memory_space<vmem>>, vector<8x256xf32>,
      %16 = arith.truncf %14 : vector<8x256xf32> to vector<8x256xbf16>
      %c0_13 = arith.constant 0 : index
      %c0_14 = arith.constant 0 : index
      %17 = vector.load %arg3[%c0_13, %c0_14] : memref<256x384xbf16, #tpu.memory_space<vmem>>, vector<256x384xbf16>
      %cst_15 = arith.constant dense<0.000000e+00> : vector<8x384xf32>
      %18 = tpu.matmul %16, %17, %cst_15 {dimension_numbers = #tpu.dot_dimension_numbers<[1], [0], [0], [1], [0, 0, 1, 1], [], []>} : vector<8x256xbf16>, vector<256x384xbf16>, vector<8x384xf32> -> vector<8x384xf32>
      %c0_16 = arith.constant 0 : index
      %c0_17 = arith.constant 0 : index
      %19 = vector.load %arg4[%c0_16, %c0_17] : memref<1x384xf32, #tpu.memory_space<vmem>>, vector<1x384xf32>
      %20 = vector.broadcast %19 : vector<1x384xf32> to vector<8x384xf32>
      %21 = arith.addf %18, %20 : vector<8x384xf32>
      %22 = vector.extract_strided_slice %21 {offsets = [0, 128], sizes = [8, 256], strides = [1, 1]} : vector<8x384xf32> to vector<8x256xf32>
      %cst_18 = arith.constant 0.000000e+00 : f32
      %23 = vector.broadcast %cst_18 : f32 to vector<8x256xf32>
      %24 = arith.maximumf %22, %23 : vector<8x256xf32>
      %25 = arith.truncf %24 : vector<8x256xf32> to vector<8x256xbf16>
      %c0_19 = arith.constant 0 : index
      %c0_20 = arith.constant 0 : index
      %26 = vector.load %arg5[%c0_19, %c0_20] : memref<256x128xbf16, #tpu.memory_space<vmem>>, vector<256x128xbf16>
      %cst_21 = arith.constant dense<0.000000e+00> : vector<8x128xf32>
      %27 = tpu.matmul %25, %26, %cst_21 {dimension_numbers = #tpu.dot_dimension_numbers<[1], [0], [0], [1], [0, 0, 1, 1], [], []>} : vector<8x256xbf16>, vector<256x128xbf16>, vector<8x128xf32> -> vector<8x128xf32>
      %c0_22 = arith.constant 0 : index
      %c0_23 = arith.constant 0 : index
      %28 = vector.load %arg6[%c0_22, %c0_23] : memref<1x128xf32, #tpu.memory_space<vmem>>, vector<1x128xf32>
      %29 = vector.broadcast %28 : vector<1x128xf32> to vector<8x128xf32>
      %30 = arith.addf %27, %29 : vector<8x128xf32>
      %c0_24 = arith.constant 0 : index
      %c0_25 = arith.constant 0 : index
      %31 = vector.load %arg7[%c0_24, %c0_25] : memref<8x512xf32, #tpu.memory_space<vmem>>, vector<8x128xf32>
      tpu.vector_store %arg7[%c0_24, %c0_25], %30 {strides = array<i32>} : memref<8x512xf32, #tpu.memory_space<vmem>>, vector<8x128xf32>,
      %32 = vector.extract_strided_slice %21 {offsets = [0, 0], sizes = [8, 128], strides = [1, 1]} : vector<8x384xf32> to vector<8x128xf32>
      %c0_26 = arith.constant 0 : index
      %c128 = arith.constant 128 : index
      %33 = vector.load %arg7[%c0_26, %c128] : memref<8x512xf32, #tpu.memory_space<vmem>>, vector<8x128xf32>
      tpu.vector_store %arg7[%c0_26, %c128], %32 {strides = array<i32>} : memref<8x512xf32, #tpu.memory_space<vmem>>, vector<8x128xf32>,
    } else {
    }
    return
  }
  func.func @transform_0(%arg0: i32, %arg1: i32) -> (i32, i32, i32) {
    %c0_i32 = arith.constant 0 : i32
    %c0_i32_0 = arith.constant 0 : i32
    return %arg0, %arg1, %c0_i32 : i32, i32, i32
  }
  func.func @transform_1(%arg0: i32, %arg1: i32) -> (i32, i32) {
    %c0_i32 = arith.constant 0 : i32
    %c0_i32_0 = arith.constant 0 : i32
    %c0_i32_1 = arith.constant 0 : i32
    return %c0_i32, %c0_i32_0 : i32, i32
  }
  func.func @transform_2(%arg0: i32, %arg1: i32) -> (i32, i32) {
    %c0_i32 = arith.constant 0 : i32
    %c0_i32_0 = arith.constant 0 : i32
    %c0_i32_1 = arith.constant 0 : i32
    return %c0_i32, %c0_i32_0 : i32, i32
  }
  func.func @transform_3(%arg0: i32, %arg1: i32) -> (i32, i32) {
    %c0_i32 = arith.constant 0 : i32
    %c0_i32_0 = arith.constant 0 : i32
    %c0_i32_1 = arith.constant 0 : i32
    return %c0_i32, %c0_i32_0 : i32, i32
  }
  func.func @transform_4(%arg0: i32, %arg1: i32) -> (i32, i32) {
    %c0_i32 = arith.constant 0 : i32
    %c0_i32_0 = arith.constant 0 : i32
    %c0_i32_1 = arith.constant 0 : i32
    return %c0_i32, %c0_i32_0 : i32, i32
  }
  func.func @transform_5(%arg0: i32, %arg1: i32) -> (i32, i32) {
    %c0_i32 = arith.constant 0 : i32
    %c0_i32_0 = arith.constant 0 : i32
    return %arg0, %c0_i32 : i32, i32
  }
}

</mosaic_0001>

<llo_original>
// kernel: matryoshka_forward.1
$region0: #{matryoshka_forward.1}
  #allocation0 [shape = 'u32[]', space=smem, size = 0x4, offset = 0x4, fixed_abs, tag = 'smem constant byte address 0x4 - core index']
  #allocation1 [shape = 'u32[144,128]{1,0:T(1,128)}', space=vmem, size = 0x12000, scoped, tag = 'internal scratch']
  %s0 = inlined_call_operand.hbm [shape: bf16[16,256,256], index: 0, kind: input, shape index: {}]
  %s1 = inlined_call_operand.hbm [shape: bf16[256,384], index: 1, kind: input, shape index: {}]
  %s2 = inlined_call_operand.hbm [shape: f32[1,384], index: 2, kind: input, shape index: {}]
  %s3 = inlined_call_operand.hbm [shape: bf16[256,128], index: 3, kind: input, shape index: {}]
  %s4 = inlined_call_operand.hbm [shape: f32[1,128], index: 4, kind: input, shape index: {}]
  %s5 = inlined_call_operand.vmem [shape: f32[16,512], index: 5, kind: output, shape index: {}]
  %s6 = sld [smem:[#allocation0]]
  $region81: #{matryoshka_forward.1} parent=0
    _
  %s8 = ssub.s32 1, %s6
  %s9 = scalar_select 0, %s8, %s6
  $region1: #{matryoshka_forward.1} parent=0
    #allocation2 [shape = 'u8[2097152]{0}', space=vmem, size = 0x200000, scoped, tag = 'input window, operand 0']
    #allocation3 [shape = 's32[2]{0}', space=sflag, size = 0x8, scoped, tag = 'scoped memory for matryoshka_forward.1']
    #allocation4 [shape = 'u8[196608]{0}', space=vmem, size = 0x30000, scoped, tag = 'input window, operand 1, single buffered']
    #allocation5 [shape = 's32[1]{0}', space=sflag, size = 0x4, scoped, tag = 'scoped memory for matryoshka_forward.1']
    #allocation6 [shape = 'u8[1536]{0}', space=vmem, size = 0x800, scoped, tag = 'input window, operand 2, single buffered']
    #allocation7 [shape = 'u8[65536]{0}', space=vmem, size = 0x10000, scoped, tag = 'input window, operand 3, single buffered']
    #allocation8 [shape = 's32[1]{0}', space=sflag, size = 0x4, scoped, tag = 'scoped memory for matryoshka_forward.1']
    #allocation9 [shape = 'u8[512]{0}', space=vmem, size = 0x400, scoped, tag = 'input window, operand 4, single buffered']
    %10 = vsyncpa [#allocation3], 0
    %s11 = scalar_lea.sflag [#allocation3], 1
    %12 = vsyncpa %s11, 0
    %13 = vsyncpa [#allocation5], 0
    %14 = vsyncpa [#allocation8], 0
    loop: start=0, step=1, limit=4
    $region2: #{matryoshka_forward.1} parent=1 // loop_pre_header
      _
    $region3: #{matryoshka_forward.1} parent=1 // loop_header
      %s16 = sphi 0, %s20
      %p17 = scmp.ge.s32.totalorder %s16, 4
      %s23 = sphi 0, %s35
      %s24 = sphi 0, %s31
      %s25 = sphi 0, %s23
      %s26 = sphi 0, %s24
      %s27 = sphi 0, %s25
      %s28 = sphi 0, %s26
      %s40 = sphi 0, %s42
      %s43 = sphi 0, %s40
      %s44 = sphi 0, %s43
      %s60 = sphi 0, %s44
      %s64 = sphi 0, %s64
      %s66 = sphi 0, %s64
      %s67 = sphi 0, %s66
      %s81 = sphi 0, %s67
      %s85 = sphi 0, %s85
      %s87 = sphi 0, %s85
      %s88 = sphi 0, %s87
      %s102 = sphi 0, %s88
      %s106 = sphi 0, %s106
      %s108 = sphi 0, %s106
      %s109 = sphi 0, %s108
      %s123 = sphi 0, %s109
      %s127 = sphi 0, %s127
      %s129 = sphi 0, %s127
      %s130 = sphi 0, %s129
      %s144 = sphi 0, %s130
      %s150 = sphi 0, %s152
      %s153 = sphi 0, %s150
      %s154 = sphi 0, %s153
      %s170 = sphi 0, %s154
    $region4: #{matryoshka_forward.1} parent=1 // loop_header_branch
      %19 = sbr.rel (%p17) target = $region8
    $region5: #{matryoshka_forward.1} parent=1 // loop_body
      %s21 = ssub.s32 %s16, 1
      %s22 = ssub.s32 %s16, 2
      %s29 = sadd.s32 1, %s24
      %p30 = scmp.ge.s32.totalorder %s29, 1
      %s31 = scalar_select %p30, 0, %s29
      %s32 = sadd.s32 1, %s23
      %s33 = scalar_select %p30, %s32, %s23
      %p34 = scmp.ge.s32.totalorder %s33, 2
      %s35 = scalar_select %p34, 0, %s33
      %s36 = ssub.s32 %s23, %s35
      %s37 = ssub.s32 %s24, %s31
      %s38 = sor.u32 %s36, %s37
      %p39 = scmp.eq.s32.totalorder %s38, 0
      %s41 = sadd.s32 %s40, 1
      %s42 = scalar_select %p39, %s40, %s41
      %p45 = pneg %p39
      %p46 = scmp.eq.s32.totalorder %s16, 1
      %p47 = por %p45, %p46
      %p48 = scmp.ne.s32.totalorder %s40, %s43
      %p49 = scmp.eq.s32.totalorder %s16, 0
      %p50 = por %p48, %p49
      %p51 = scmp.ne.s32.totalorder %s40, %s43
      %p52 = scmp.eq.s32.totalorder %s21, 1
      %p53 = por %p51, %p52
      %p54 = scmp.ne.s32.totalorder %s43, %s44
      %p55 = scmp.eq.s32.totalorder %s21, 0
      %p56 = por %p54, %p55
      %p57 = scmp.ne.s32.totalorder %s43, %s44
      %p58 = scmp.eq.s32.totalorder %s22, 1
      %p59 = por %p57, %p58
      %p61 = scmp.ne.s32.totalorder %s44, %s60
      %p62 = scmp.eq.s32.totalorder %s22, 0
      %p63 = por %p61, %p62
      %s65 = sadd.s32 %s64, 1
      %p68 = scmp.eq.s32.totalorder %s16, 1
      %p69 = scmp.ne.s32.totalorder %s64, %s66
      %p70 = scmp.eq.s32.totalorder %s16, 0
      %p71 = por %p69, %p70
      %p72 = scmp.ne.s32.totalorder %s64, %s66
      %p73 = scmp.eq.s32.totalorder %s21, 1
      %p74 = por %p72, %p73
      %p75 = scmp.ne.s32.totalorder %s66, %s67
      %p76 = scmp.eq.s32.totalorder %s21, 0
      %p77 = por %p75, %p76
      %p78 = scmp.ne.s32.totalorder %s66, %s67
      %p79 = scmp.eq.s32.totalorder %s22, 1
      %p80 = por %p78, %p79
      %p82 = scmp.ne.s32.totalorder %s67, %s81
      %p83 = scmp.eq.s32.totalorder %s22, 0
      %p84 = por %p82, %p83
      %s86 = sadd.s32 %s85, 1
      %p89 = scmp.eq.s32.totalorder %s16, 1
      %p90 = scmp.ne.s32.totalorder %s85, %s87
      %p91 = scmp.eq.s32.totalorder %s16, 0
      %p92 = por %p90, %p91
      %p93 = scmp.ne.s32.totalorder %s85, %s87
      %p94 = scmp.eq.s32.totalorder %s21, 1
      %p95 = por %p93, %p94
      %p96 = scmp.ne.s32.totalorder %s87, %s88
      %p97 = scmp.eq.s32.totalorder %s21, 0
      %p98 = por %p96, %p97
      %p99 = scmp.ne.s32.totalorder %s87, %s88
      %p100 = scmp.eq.s32.totalorder %s22, 1
      %p101 = por %p99, %p100
      %p103 = scmp.ne.s32.totalorder %s88, %s102
      %p104 = scmp.eq.s32.totalorder %s22, 0
      %p105 = por %p103, %p104
      %s107 = sadd.s32 %s106, 1
      %p110 = scmp.eq.s32.totalorder %s16, 1
      %p111 = scmp.ne.s32.totalorder %s106, %s108
      %p112 = scmp.eq.s32.totalorder %s16, 0
      %p113 = por %p111, %p112
      %p114 = scmp.ne.s32.totalorder %s106, %s108
      %p115 = scmp.eq.s32.totalorder %s21, 1
      %p116 = por %p114, %p115
      %p117 = scmp.ne.s32.totalorder %s108, %s109
      %p118 = scmp.eq.s32.totalorder %s21, 0
      %p119 = por %p117, %p118
      %p120 = scmp.ne.s32.totalorder %s108, %s109
      %p121 = scmp.eq.s32.totalorder %s22, 1
      %p122 = por %p120, %p121
      %p124 = scmp.ne.s32.totalorder %s109, %s123
      %p125 = scmp.eq.s32.totalorder %s22, 0
      %p126 = por %p124, %p125
      %s128 = sadd.s32 %s127, 1
      %p131 = scmp.eq.s32.totalorder %s16, 1
      %p132 = scmp.ne.s32.totalorder %s127, %s129
      %p133 = scmp.eq.s32.totalorder %s16, 0
      %p134 = por %p132, %p133
      %p135 = scmp.ne.s32.totalorder %s127, %s129
      %p136 = scmp.eq.s32.totalorder %s21, 1
      %p137 = por %p135, %p136
      %p138 = scmp.ne.s32.totalorder %s129, %s130
      %p139 = scmp.eq.s32.totalorder %s21, 0
      %p140 = por %p138, %p139
      %p141 = scmp.ne.s32.totalorder %s129, %s130
      %p142 = scmp.eq.s32.totalorder %s22, 1
      %p143 = por %p141, %p142
      %p145 = scmp.ne.s32.totalorder %s130, %s144
      %p146 = scmp.eq.s32.totalorder %s22, 0
      %p147 = por %p145, %p146
      %s148 = ssub.s32 %s23, %s35
      %p149 = scmp.eq.s32.totalorder %s148, 0
      %s151 = sadd.s32 %s150, 1
      %s152 = scalar_select %p149, %s150, %s151
      %p155 = pneg %p149
      %p156 = scmp.eq.s32.totalorder %s16, 1
      %p157 = por %p155, %p156
      %p158 = scmp.ne.s32.totalorder %s150, %s153
      %p159 = scmp.eq.s32.totalorder %s16, 0
      %p160 = por %p158, %p159
      %p161 = scmp.ne.s32.totalorder %s150, %s153
      %p162 = scmp.eq.s32.totalorder %s21, 1
      %p163 = por %p161, %p162
      %p164 = scmp.ne.s32.totalorder %s153, %s154
      %p165 = scmp.eq.s32.totalorder %s21, 0
      %p166 = por %p164, %p165
      %p167 = scmp.ne.s32.totalorder %s153, %s154
      %p168 = scmp.eq.s32.totalorder %s22, 1
      %p169 = por %p167, %p168
      %p171 = scmp.ne.s32.totalorder %s154, %s170
      %p172 = scmp.eq.s32.totalorder %s22, 0
      %p173 = por %p171, %p172
      %p174 = scmp.le.s32.totalorder 1, %s16
      %p175 = scmp.lt.s32.totalorder %s16, 3
      %p176 = pnand %p174, %p175
      %p177 = pneg %p176
      // Predicated region
      $region9: #{matryoshka_forward.1} parent=5 // pred_check
        _
      $region10: #{matryoshka_forward.1} parent=5 // pred_check_branch
        %179 = sbr.rel (%p176) target = $region12
      $region11: #{matryoshka_forward.1} parent=5 // pred_region
        %s180 = ssub.s32 %s16, 1
        // Predicated region
        $region13: #{matryoshka_forward.1} parent=11 // pred_check
          %p181 = pneg %p77
        $region14: #{matryoshka_forward.1} parent=11 // pred_check_branch
          %183 = sbr.rel (%p181) target = $region16
        $region15: #{matryoshka_forward.1} parent=11 // pred_region
          %s185 = ssub.s32 6144, 6144
          %186 = vsyncadd [#allocation5], %s185
          %s187 = sshll.u32 [#allocation4], 4
          %s188 = int_to_ptr.vmem [resolvable:$true] %s187
          %193 = dma.hbm_to_vmem [thread:$0]  %s1, 6144, %s188, [#allocation5], 192, 192, 12
        $region16: #{matryoshka_forward.1} parent=11 // pred_fallthru
          _
        // Predicated region
        $region17: #{matryoshka_forward.1} parent=11 // pred_check
          %p194 = pneg %p98
        $region18: #{matryoshka_forward.1} parent=11 // pred_check_branch
          %196 = sbr.rel (%p194) target = $region20
        $region19: #{matryoshka_forward.1} parent=11 // pred_region
          %s198 = ssub.s32 48, 48
          %199 = vsyncadd [#allocation5], %s198
          %s201 = sshll.u32 [#allocation6], 4
          %s202 = int_to_ptr.vmem [resolvable:$true] %s201
          %204 = dma.hbm_to_vmem [thread:$0]  %s2, 48, %s202, [#allocation5]
        $region20: #{matryoshka_forward.1} parent=11 // pred_fallthru
          _
        // Predicated region
        $region21: #{matryoshka_forward.1} parent=11 // pred_check
          %p205 = pneg %p119
        $region22: #{matryoshka_forward.1} parent=11 // pred_check_branch
          %207 = sbr.rel (%p205) target = $region24
        $region23: #{matryoshka_forward.1} parent=11 // pred_region
          %s209 = ssub.s32 2048, 2048
          %210 = vsyncadd [#allocation8], %s209
          %s211 = sshll.u32 [#allocation7], 4
          %s212 = int_to_ptr.vmem [resolvable:$true] %s211
          %217 = dma.hbm_to_vmem [thread:$0]  %s3, 2048, %s212, [#allocation8], 64, 64, 4
        $region24: #{matryoshka_forward.1} parent=11 // pred_fallthru
          _
        // Predicated region
        $region25: #{matryoshka_forward.1} parent=11 // pred_check
          %p218 = pneg %p140
        $region26: #{matryoshka_forward.1} parent=11 // pred_check_branch
          %220 = sbr.rel (%p218) target = $region28
        $region27: #{matryoshka_forward.1} parent=11 // pred_region
          %s222 = ssub.s32 16, 16
          %223 = vsyncadd [#allocation8], %s222
          %s225 = sshll.u32 [#allocation9], 4
          %s226 = int_to_ptr.vmem [resolvable:$true] %s225
          %228 = dma.hbm_to_vmem [thread:$0]  %s4, 16, %s226, [#allocation8]
        $region28: #{matryoshka_forward.1} parent=11 // pred_fallthru
          _
      $region12: #{matryoshka_forward.1} parent=5 // pred_fallthru
        _
      %p229 = scmp.lt.s32.totalorder %s16, 2
      // Predicated region
      $region29: #{matryoshka_forward.1} parent=5 // pred_check
        %p230 = pneg %p229
      $region30: #{matryoshka_forward.1} parent=5 // pred_check_branch
        %232 = sbr.rel (%p230) target = $region32
      $region31: #{matryoshka_forward.1} parent=5 // pred_region
        // Predicated region
        $region33: #{matryoshka_forward.1} parent=31 // pred_check
          %p233 = pneg %p50
        $region34: #{matryoshka_forward.1} parent=31 // pred_check_branch
          %235 = sbr.rel (%p233) target = $region36
        $region35: #{matryoshka_forward.1} parent=31 // pred_region
          %s236 = sand.u32 %s40, 1
          %s237 = scalar_lea.sflag [#allocation3], %s236
          %s238 = sand.u32 %s40, 1
          %s239 = smul.addr %s238, 2048
          %s240 = scalar_lea.vmem [#allocation2], %s239
          %s241 = smul.u32 8, %s23
          %s242 = smul.u32 32, %s24
          %s244 = ssub.s32 32768, 32768
          %245 = vsyncadd %s237, %s244
          %s246 = smul.addr %s242, 2
          %s247 = smul.addr %s241, 64
          %s248 = sadd.s32 %s246, %s247
          %s249 = smul.addr %s248, 64
          %s250 = scalar_lea.hbm %s0, %s249
          %s251 = sshll.u32 %s240, 4
          %s252 = int_to_ptr.vmem [resolvable:$true] %s251
          %257 = dma.hbm_to_vmem [thread:$0]  %s250, 32768, %s252, %s237, 128, 128, 8
        $region36: #{matryoshka_forward.1} parent=31 // pred_fallthru
          _
      $region32: #{matryoshka_forward.1} parent=5 // pred_fallthru
        _
      %p258 = scmp.le.s32.totalorder 1, %s16
      %p259 = scmp.lt.s32.totalorder %s16, 3
      %p260 = pnand %p258, %p259
      %p261 = pneg %p260
      // Predicated region
      $region37: #{matryoshka_forward.1} parent=5 // pred_check
        _
      $region38: #{matryoshka_forward.1} parent=5 // pred_check_branch
        %263 = sbr.rel (%p260) target = $region40
      $region39: #{matryoshka_forward.1} parent=5 // pred_region
        %s264 = ssub.s32 %s16, 1
        %s265 = sand.u32 %s43, 1
        %s266 = scalar_lea.sflag [#allocation3], %s265
        %s267 = sand.u32 %s43, 1
        %s268 = smul.addr %s267, 2048
        %s269 = scalar_lea.vmem [#allocation2], %s268
        // Predicated region
        $region41: #{matryoshka_forward.1} parent=39 // pred_check
          %p270 = pneg %p56
        $region42: #{matryoshka_forward.1} parent=39 // pred_check_branch
          %272 = sbr.rel (%p270) target = $region44
        $region43: #{matryoshka_forward.1} parent=39 // pred_region
          %273 = dma.done %s266, 32768
        $region44: #{matryoshka_forward.1} parent=39 // pred_fallthru
          _
        // Predicated region
        $region45: #{matryoshka_forward.1} parent=39 // pred_check
          %p274 = pneg %p77
        $region46: #{matryoshka_forward.1} parent=39 // pred_check_branch
          %276 = sbr.rel (%p274) target = $region48
        $region47: #{matryoshka_forward.1} parent=39 // pred_region
          %277 = dma.done [#allocation5], 6144
        $region48: #{matryoshka_forward.1} parent=39 // pred_fallthru
          _
        // Predicated region
        $region49: #{matryoshka_forward.1} parent=39 // pred_check
          %p278 = pneg %p98
        $region50: #{matryoshka_forward.1} parent=39 // pred_check_branch
          %280 = sbr.rel (%p278) target = $region52
        $region51: #{matryoshka_forward.1} parent=39 // pred_region
          %281 = dma.done [#allocation5], 48
        $region52: #{matryoshka_forward.1} parent=39 // pred_fallthru
          _
        // Predicated region
        $region53: #{matryoshka_forward.1} parent=39 // pred_check
          %p282 = pneg %p119
        $region54: #{matryoshka_forward.1} parent=39 // pred_check_branch
          %284 = sbr.rel (%p282) target = $region56
        $region55: #{matryoshka_forward.1} parent=39 // pred_region
          %285 = dma.done [#allocation8], 2048
        $region56: #{matryoshka_forward.1} parent=39 // pred_fallthru
          _
        // Predicated region
        $region57: #{matryoshka_forward.1} parent=39 // pred_check
          %p286 = pneg %p140
        $region58: #{matryoshka_forward.1} parent=39 // pred_check_branch
          %288 = sbr.rel (%p286) target = $region60
        $region59: #{matryoshka_forward.1} parent=39 // pred_region
          %289 = dma.done [#allocation8], 16
        $region60: #{matryoshka_forward.1} parent=39 // pred_fallthru
          _
        %s290 = sand.u32 %s43, 1
        %s291 = scalar_lea.sflag [#allocation3], %s290
        %s292 = sand.u32 %s43, 1
        %s293 = smul.addr %s292, 2048
        %s294 = scalar_lea.vmem [#allocation2], %s293
        %p295 = pneg %p56
        %p296 = pneg %p53
        %p297 = pneg %p77
        %p298 = pneg %p74
        %p299 = pneg %p98
        %p300 = pneg %p95
        %p301 = pneg %p119
        %p302 = pneg %p116
        %p303 = pneg %p140
        %p304 = pneg %p137
        %p305 = pneg %p166
        %p306 = pneg %p163
        %p307 = scmp.lt.s32.totalorder %s25, 1
        %s308 = scalar_select %p307, %s25, 1
        %s309 = smul.addr %s308, 4
        %s310 = smul.addr %s309, 8
        %s311 = scalar_lea.vmem %s5, %s310
        %s312 = smul.u32 8, %s25
        %s313 = smul.u32 32, %s26
        %p314 = scmp.lt.s32.totalorder %s25, 1
        %s315 = scalar_select %p314, %s25, 1
        %s316 = smul.addr %s315, 4
        %s317 = smul.addr %s316, 8
        %s318 = scalar_lea.vmem %s5, %s317
        %p320 = scmp.eq.s32.totalorder %s26, 0
        // Predicated region
        $region61: #{matryoshka_forward.1} parent=39 // pred_check
          %p321 = pneg %p320
        $region62: #{matryoshka_forward.1} parent=39 // pred_check_branch
          %323 = sbr.rel (%p321) target = $region64
        $region63: #{matryoshka_forward.1} parent=39 // pred_region
          %324 = vst [vmem:[%s318] sm:$0xff] 0.0
          %325 = vst [vmem:[%s318 + $0x8] sm:$0xff] 0.0
          %326 = vst [vmem:[%s318 + $0x10] sm:$0xff] 0.0
          %327 = vst [vmem:[%s318 + $0x18] sm:$0xff] 0.0
        $region64: #{matryoshka_forward.1} parent=39 // pred_fallthru
          _
        %v328 = vld [vmem:[%s318 + $0x10] sm:$0xff]
        %v329 = vld [vmem:[%s318 + $0x18] sm:$0xff]
        %v330 = vld [vmem:[%s269] sm:$0xff]
        %v331 = vld [vmem:[%s269 + $0x8] sm:$0xff]
        %v332 = vld [vmem:[%s269 + $0x10] sm:$0xff]
        %v333 = vld [vmem:[%s269 + $0x18] sm:$0xff]
        %v334 = vld [vmem:[%s269 + $0x20] sm:$0xff]
        %v335 = vld [vmem:[%s269 + $0x28] sm:$0xff]
        %v336 = vld [vmem:[%s269 + $0x30] sm:$0xff]
        %v337 = vld [vmem:[%s269 + $0x38] sm:$0xff]
        %v338 = vld [vmem:[%s269 + $0x40] sm:$0xff]
        %v339 = vld [vmem:[%s269 + $0x48] sm:$0xff]
        %v340 = vld [vmem:[%s269 + $0x50] sm:$0xff]
        %v341 = vld [vmem:[%s269 + $0x58] sm:$0xff]
        %v342 = vld [vmem:[%s269 + $0x60] sm:$0xff]
        %v343 = vld [vmem:[%s269 + $0x68] sm:$0xff]
        %v344 = vld [vmem:[%s269 + $0x70] sm:$0xff]
        %v345 = vld [vmem:[%s269 + $0x78] sm:$0xff]
        %v346 = vld [vmem:[%s269 + $0x80] sm:$0xff]
        %v347 = vld [vmem:[%s269 + $0x88] sm:$0xff]
        %v348 = vld [vmem:[%s269 + $0x90] sm:$0xff]
        %v349 = vld [vmem:[%s269 + $0x98] sm:$0xff]
        %v350 = vld [vmem:[%s269 + $0xa0] sm:$0xff]
        %v351 = vld [vmem:[%s269 + $0xa8] sm:$0xff]
        %v352 = vld [vmem:[%s269 + $0xb0] sm:$0xff]
        %v353 = vld [vmem:[%s269 + $0xb8] sm:$0xff]
        %v354 = vld [vmem:[%s269 + $0xc0] sm:$0xff]
        %v355 = vld [vmem:[%s269 + $0xc8] sm:$0xff]
        %v356 = vld [vmem:[%s269 + $0xd0] sm:$0xff]
        %v357 = vld [vmem:[%s269 + $0xd8] sm:$0xff]
        %v358 = vld [vmem:[%s269 + $0xe0] sm:$0xff]
        %v359 = vld [vmem:[%s269 + $0xe8] sm:$0xff]
        %v360 = vld [vmem:[%s269 + $0xf0] sm:$0xff]
        %v361 = vld [vmem:[%s269 + $0xf8] sm:$0xff]
        %v362 = vld [vmem:[%s269 + $0x100] sm:$0xff]
        %v363 = vld [vmem:[%s269 + $0x108] sm:$0xff]
        %v364 = vld [vmem:[%s269 + $0x110] sm:$0xff]
        %v365 = vld [vmem:[%s269 + $0x118] sm:$0xff]
        %v366 = vld [vmem:[%s269 + $0x120] sm:$0xff]
        %v367 = vld [vmem:[%s269 + $0x128] sm:$0xff]
        %v368 = vld [vmem:[%s269 + $0x130] sm:$0xff]
        %v369 = vld [vmem:[%s269 + $0x138] sm:$0xff]
        %v370 = vld [vmem:[%s269 + $0x140] sm:$0xff]
        %v371 = vld [vmem:[%s269 + $0x148] sm:$0xff]
        %v372 = vld [vmem:[%s269 + $0x150] sm:$0xff]
        %v373 = vld [vmem:[%s269 + $0x158] sm:$0xff]
        %v374 = vld [vmem:[%s269 + $0x160] sm:$0xff]
        %v375 = vld [vmem:[%s269 + $0x168] sm:$0xff]
        %v376 = vld [vmem:[%s269 + $0x170] sm:$0xff]
        %v377 = vld [vmem:[%s269 + $0x178] sm:$0xff]
        %v378 = vld [vmem:[%s269 + $0x180] sm:$0xff]
        %v379 = vld [vmem:[%s269 + $0x188] sm:$0xff]
        %v380 = vld [vmem:[%s269 + $0x190] sm:$0xff]
        %v381 = vld [vmem:[%s269 + $0x198] sm:$0xff]
        %v382 = vld [vmem:[%s269 + $0x1a0] sm:$0xff]
        %v383 = vld [vmem:[%s269 + $0x1a8] sm:$0xff]
        %v384 = vld [vmem:[%s269 + $0x1b0] sm:$0xff]
        %v385 = vld [vmem:[%s269 + $0x1b8] sm:$0xff]
        %v386 = vld [vmem:[%s269 + $0x1c0] sm:$0xff]
        %v387 = vld [vmem:[%s269 + $0x1c8] sm:$0xff]
        %v388 = vld [vmem:[%s269 + $0x1d0] sm:$0xff]
        %v389 = vld [vmem:[%s269 + $0x1d8] sm:$0xff]
        %v390 = vld [vmem:[%s269 + $0x1e0] sm:$0xff]
        %v391 = vld [vmem:[%s269 + $0x1e8] sm:$0xff]
        %v392 = vld [vmem:[%s269 + $0x1f0] sm:$0xff]
        %v393 = vld [vmem:[%s269 + $0x1f8] sm:$0xff]
        %v394 = vld [vmem:[%s269 + $0x200] sm:$0xff]
        %v395 = vld [vmem:[%s269 + $0x208] sm:$0xff]
        %v396 = vld [vmem:[%s269 + $0x210] sm:$0xff]
        %v397 = vld [vmem:[%s269 + $0x218] sm:$0xff]
        %v398 = vld [vmem:[%s269 + $0x220] sm:$0xff]
        %v399 = vld [vmem:[%s269 + $0x228] sm:$0xff]
        %v400 = vld [vmem:[%s269 + $0x230] sm:$0xff]
        %v401 = vld [vmem:[%s269 + $0x238] sm:$0xff]
        %v402 = vld [vmem:[%s269 + $0x240] sm:$0xff]
        %v403 = vld [vmem:[%s269 + $0x248] sm:$0xff]
        %v404 = vld [vmem:[%s269 + $0x250] sm:$0xff]
        %v405 = vld [vmem:[%s269 + $0x258] sm:$0xff]
        %v406 = vld [vmem:[%s269 + $0x260] sm:$0xff]
        %v407 = vld [vmem:[%s269 + $0x268] sm:$0xff]
        %v408 = vld [vmem:[%s269 + $0x270] sm:$0xff]
        %v409 = vld [vmem:[%s269 + $0x278] sm:$0xff]
        %v410 = vld [vmem:[%s269 + $0x280] sm:$0xff]
        %v411 = vld [vmem:[%s269 + $0x288] sm:$0xff]
        %v412 = vld [vmem:[%s269 + $0x290] sm:$0xff]
        %v413 = vld [vmem:[%s269 + $0x298] sm:$0xff]
        %v414 = vld [vmem:[%s269 + $0x2a0] sm:$0xff]
        %v415 = vld [vmem:[%s269 + $0x2a8] sm:$0xff]
        %v416 = vld [vmem:[%s269 + $0x2b0] sm:$0xff]
        %v417 = vld [vmem:[%s269 + $0x2b8] sm:$0xff]
        %v418 = vld [vmem:[%s269 + $0x2c0] sm:$0xff]
        %v419 = vld [vmem:[%s269 + $0x2c8] sm:$0xff]
        %v420 = vld [vmem:[%s269 + $0x2d0] sm:$0xff]
        %v421 = vld [vmem:[%s269 + $0x2d8] sm:$0xff]
        %v422 = vld [vmem:[%s269 + $0x2e0] sm:$0xff]
        %v423 = vld [vmem:[%s269 + $0x2e8] sm:$0xff]
        %v424 = vld [vmem:[%s269 + $0x2f0] sm:$0xff]
        %v425 = vld [vmem:[%s269 + $0x2f8] sm:$0xff]
        %v426 = vld [vmem:[%s269 + $0x300] sm:$0xff]
        %v427 = vld [vmem:[%s269 + $0x308] sm:$0xff]
        %v428 = vld [vmem:[%s269 + $0x310] sm:$0xff]
        %v429 = vld [vmem:[%s269 + $0x318] sm:$0xff]
        %v430 = vld [vmem:[%s269 + $0x320] sm:$0xff]
        %v431 = vld [vmem:[%s269 + $0x328] sm:$0xff]
        %v432 = vld [vmem:[%s269 + $0x330] sm:$0xff]
        %v433 = vld [vmem:[%s269 + $0x338] sm:$0xff]
        %v434 = vld [vmem:[%s269 + $0x340] sm:$0xff]
        %v435 = vld [vmem:[%s269 + $0x348] sm:$0xff]
        %v436 = vld [vmem:[%s269 + $0x350] sm:$0xff]
        %v437 = vld [vmem:[%s269 + $0x358] sm:$0xff]
        %v438 = vld [vmem:[%s269 + $0x360] sm:$0xff]
        %v439 = vld [vmem:[%s269 + $0x368] sm:$0xff]
        %v440 = vld [vmem:[%s269 + $0x370] sm:$0xff]
        %v441 = vld [vmem:[%s269 + $0x378] sm:$0xff]
        %v442 = vld [vmem:[%s269 + $0x380] sm:$0xff]
        %v443 = vld [vmem:[%s269 + $0x388] sm:$0xff]
        %v444 = vld [vmem:[%s269 + $0x390] sm:$0xff]
        %v445 = vld [vmem:[%s269 + $0x398] sm:$0xff]
        %v446 = vld [vmem:[%s269 + $0x3a0] sm:$0xff]
        %v447 = vld [vmem:[%s269 + $0x3a8] sm:$0xff]
        %v448 = vld [vmem:[%s269 + $0x3b0] sm:$0xff]
        %v449 = vld [vmem:[%s269 + $0x3b8] sm:$0xff]
        %v450 = vld [vmem:[%s269 + $0x3c0] sm:$0xff]
        %v451 = vld [vmem:[%s269 + $0x3c8] sm:$0xff]
        %v452 = vld [vmem:[%s269 + $0x3d0] sm:$0xff]
        %v453 = vld [vmem:[%s269 + $0x3d8] sm:$0xff]
        %v454 = vld [vmem:[%s269 + $0x3e0] sm:$0xff]
        %v455 = vld [vmem:[%s269 + $0x3e8] sm:$0xff]
        %v456 = vld [vmem:[%s269 + $0x3f0] sm:$0xff]
        %v457 = vld [vmem:[%s269 + $0x3f8] sm:$0xff]
        %v458 = vld [vmem:[%s269 + $0x400] sm:$0xff]
        %v459 = vld [vmem:[%s269 + $0x408] sm:$0xff]
        %v460 = vld [vmem:[%s269 + $0x410] sm:$0xff]
        %v461 = vld [vmem:[%s269 + $0x418] sm:$0xff]
        %v462 = vld [vmem:[%s269 + $0x420] sm:$0xff]
        %v463 = vld [vmem:[%s269 + $0x428] sm:$0xff]
        %v464 = vld [vmem:[%s269 + $0x430] sm:$0xff]
        %v465 = vld [vmem:[%s269 + $0x438] sm:$0xff]
        %v466 = vld [vmem:[%s269 + $0x440] sm:$0xff]
        %v467 = vld [vmem:[%s269 + $0x448] sm:$0xff]
        %v468 = vld [vmem:[%s269 + $0x450] sm:$0xff]
        %v469 = vld [vmem:[%s269 + $0x458] sm:$0xff]
        %v470 = vld [vmem:[%s269 + $0x460] sm:$0xff]
        %v471 = vld [vmem:[%s269 + $0x468] sm:$0xff]
        %v472 = vld [vmem:[%s269 + $0x470] sm:$0xff]
        %v473 = vld [vmem:[%s269 + $0x478] sm:$0xff]
        %v474 = vld [vmem:[%s269 + $0x480] sm:$0xff]
        %v475 = vld [vmem:[%s269 + $0x488] sm:$0xff]
        %v476 = vld [vmem:[%s269 + $0x490] sm:$0xff]
        %v477 = vld [vmem:[%s269 + $0x498] sm:$0xff]
        %v478 = vld [vmem:[%s269 + $0x4a0] sm:$0xff]
        %v479 = vld [vmem:[%s269 + $0x4a8] sm:$0xff]
        %v480 = vld [vmem:[%s269 + $0x4b0] sm:$0xff]
        %v481 = vld [vmem:[%s269 + $0x4b8] sm:$0xff]
        %v482 = vld [vmem:[%s269 + $0x4c0] sm:$0xff]
        %v483 = vld [vmem:[%s269 + $0x4c8] sm:$0xff]
        %v484 = vld [vmem:[%s269 + $0x4d0] sm:$0xff]
        %v485 = vld [vmem:[%s269 + $0x4d8] sm:$0xff]
        %v486 = vld [vmem:[%s269 + $0x4e0] sm:$0xff]
        %v487 = vld [vmem:[%s269 + $0x4e8] sm:$0xff]
        %v488 = vld [vmem:[%s269 + $0x4f0] sm:$0xff]
        %v489 = vld [vmem:[%s269 + $0x4f8] sm:$0xff]
        %v490 = vld [vmem:[%s269 + $0x500] sm:$0xff]
        %v491 = vld [vmem:[%s269 + $0x508] sm:$0xff]
        %v492 = vld [vmem:[%s269 + $0x510] sm:$0xff]
        %v493 = vld [vmem:[%s269 + $0x518] sm:$0xff]
        %v494 = vld [vmem:[%s269 + $0x520] sm:$0xff]
        %v495 = vld [vmem:[%s269 + $0x528] sm:$0xff]
        %v496 = vld [vmem:[%s269 + $0x530] sm:$0xff]
        %v497 = vld [vmem:[%s269 + $0x538] sm:$0xff]
        %v498 = vld [vmem:[%s269 + $0x540] sm:$0xff]
        %v499 = vld [vmem:[%s269 + $0x548] sm:$0xff]
        %v500 = vld [vmem:[%s269 + $0x550] sm:$0xff]
        %v501 = vld [vmem:[%s269 + $0x558] sm:$0xff]
        %v502 = vld [vmem:[%s269 + $0x560] sm:$0xff]
        %v503 = vld [vmem:[%s269 + $0x568] sm:$0xff]
        %v504 = vld [vmem:[%s269 + $0x570] sm:$0xff]
        %v505 = vld [vmem:[%s269 + $0x578] sm:$0xff]
        %v506 = vld [vmem:[%s269 + $0x580] sm:$0xff]
        %v507 = vld [vmem:[%s269 + $0x588] sm:$0xff]
        %v508 = vld [vmem:[%s269 + $0x590] sm:$0xff]
        %v509 = vld [vmem:[%s269 + $0x598] sm:$0xff]
        %v510 = vld [vmem:[%s269 + $0x5a0] sm:$0xff]
        %v511 = vld [vmem:[%s269 + $0x5a8] sm:$0xff]
        %v512 = vld [vmem:[%s269 + $0x5b0] sm:$0xff]
        %v513 = vld [vmem:[%s269 + $0x5b8] sm:$0xff]
        %v514 = vld [vmem:[%s269 + $0x5c0] sm:$0xff]
        %v515 = vld [vmem:[%s269 + $0x5c8] sm:$0xff]
        %v516 = vld [vmem:[%s269 + $0x5d0] sm:$0xff]
        %v517 = vld [vmem:[%s269 + $0x5d8] sm:$0xff]
        %v518 = vld [vmem:[%s269 + $0x5e0] sm:$0xff]
        %v519 = vld [vmem:[%s269 + $0x5e8] sm:$0xff]
        %v520 = vld [vmem:[%s269 + $0x5f0] sm:$0xff]
        %v521 = vld [vmem:[%s269 + $0x5f8] sm:$0xff]
        %v522 = vld [vmem:[%s269 + $0x600] sm:$0xff]
        %v523 = vld [vmem:[%s269 + $0x608] sm:$0xff]
        %v524 = vld [vmem:[%s269 + $0x610] sm:$0xff]
        %v525 = vld [vmem:[%s269 + $0x618] sm:$0xff]
        %v526 = vld [vmem:[%s269 + $0x620] sm:$0xff]
        %v527 = vld [vmem:[%s269 + $0x628] sm:$0xff]
        %v528 = vld [vmem:[%s269 + $0x630] sm:$0xff]
        %v529 = vld [vmem:[%s269 + $0x638] sm:$0xff]
        %v530 = vld [vmem:[%s269 + $0x640] sm:$0xff]
        %v531 = vld [vmem:[%s269 + $0x648] sm:$0xff]
        %v532 = vld [vmem:[%s269 + $0x650] sm:$0xff]
        %v533 = vld [vmem:[%s269 + $0x658] sm:$0xff]
        %v534 = vld [vmem:[%s269 + $0x660] sm:$0xff]
        %v535 = vld [vmem:[%s269 + $0x668] sm:$0xff]
        %v536 = vld [vmem:[%s269 + $0x670] sm:$0xff]
        %v537 = vld [vmem:[%s269 + $0x678] sm:$0xff]
        %v538 = vld [vmem:[%s269 + $0x680] sm:$0xff]
        %v539 = vld [vmem:[%s269 + $0x688] sm:$0xff]
        %v540 = vld [vmem:[%s269 + $0x690] sm:$0xff]
        %v541 = vld [vmem:[%s269 + $0x698] sm:$0xff]
        %v542 = vld [vmem:[%s269 + $0x6a0] sm:$0xff]
        %v543 = vld [vmem:[%s269 + $0x6a8] sm:$0xff]
        %v544 = vld [vmem:[%s269 + $0x6b0] sm:$0xff]
        %v545 = vld [vmem:[%s269 + $0x6b8] sm:$0xff]
        %v546 = vld [vmem:[%s269 + $0x6c0] sm:$0xff]
        %v547 = vld [vmem:[%s269 + $0x6c8] sm:$0xff]
        %v548 = vld [vmem:[%s269 + $0x6d0] sm:$0xff]
        %v549 = vld [vmem:[%s269 + $0x6d8] sm:$0xff]
        %v550 = vld [vmem:[%s269 + $0x6e0] sm:$0xff]
        %v551 = vld [vmem:[%s269 + $0x6e8] sm:$0xff]
        %v552 = vld [vmem:[%s269 + $0x6f0] sm:$0xff]
        %v553 = vld [vmem:[%s269 + $0x6f8] sm:$0xff]
        %v554 = vld [vmem:[%s269 + $0x700] sm:$0xff]
        %v555 = vld [vmem:[%s269 + $0x708] sm:$0xff]
        %v556 = vld [vmem:[%s269 + $0x710] sm:$0xff]
        %v557 = vld [vmem:[%s269 + $0x718] sm:$0xff]
        %v558 = vld [vmem:[%s269 + $0x720] sm:$0xff]
        %v559 = vld [vmem:[%s269 + $0x728] sm:$0xff]
        %v560 = vld [vmem:[%s269 + $0x730] sm:$0xff]
        %v561 = vld [vmem:[%s269 + $0x738] sm:$0xff]
        %v562 = vld [vmem:[%s269 + $0x740] sm:$0xff]
        %v563 = vld [vmem:[%s269 + $0x748] sm:$0xff]
        %v564 = vld [vmem:[%s269 + $0x750] sm:$0xff]
        %v565 = vld [vmem:[%s269 + $0x758] sm:$0xff]
        %v566 = vld [vmem:[%s269 + $0x760] sm:$0xff]
        %v567 = vld [vmem:[%s269 + $0x768] sm:$0xff]
        %v568 = vld [vmem:[%s269 + $0x770] sm:$0xff]
        %v569 = vld [vmem:[%s269 + $0x778] sm:$0xff]
        %v570 = vld [vmem:[%s269 + $0x780] sm:$0xff]
        %v571 = vld [vmem:[%s269 + $0x788] sm:$0xff]
        %v572 = vld [vmem:[%s269 + $0x790] sm:$0xff]
        %v573 = vld [vmem:[%s269 + $0x798] sm:$0xff]
        %v574 = vld [vmem:[%s269 + $0x7a0] sm:$0xff]
        %v575 = vld [vmem:[%s269 + $0x7a8] sm:$0xff]
        %v576 = vld [vmem:[%s269 + $0x7b0] sm:$0xff]
        %v577 = vld [vmem:[%s269 + $0x7b8] sm:$0xff]
        %v578 = vld [vmem:[%s269 + $0x7c0] sm:$0xff]
        %v579 = vld [vmem:[%s269 + $0x7c8] sm:$0xff]
        %v580 = vld [vmem:[%s269 + $0x7d0] sm:$0xff]
        %v581 = vld [vmem:[%s269 + $0x7d8] sm:$0xff]
        %v582 = vld [vmem:[%s269 + $0x7e0] sm:$0xff]
        %v583 = vld [vmem:[%s269 + $0x7e8] sm:$0xff]
        %v584 = vld [vmem:[%s269 + $0x7f0] sm:$0xff]
        %v585 = vld [vmem:[%s269 + $0x7f8] sm:$0xff]
        %v586 = vunpack.c.l.bf16 %v330
        %v587 = vunpack.c.h.bf16 %v330
        %v588 = vunpack.c.l.bf16 %v331
        %v589 = vunpack.c.h.bf16 %v331
        %v590 = vunpack.c.l.bf16 %v332
        %v591 = vunpack.c.h.bf16 %v332
        %v592 = vunpack.c.l.bf16 %v333
        %v593 = vunpack.c.h.bf16 %v333
        %v594 = vunpack.c.l.bf16 %v334
        %v595 = vunpack.c.h.bf16 %v334
        %v596 = vunpack.c.l.bf16 %v335
        %v597 = vunpack.c.h.bf16 %v335
        %v598 = vunpack.c.l.bf16 %v336
        %v599 = vunpack.c.h.bf16 %v336
        %v600 = vunpack.c.l.bf16 %v337
        %v601 = vunpack.c.h.bf16 %v337
        %v602 = vunpack.c.l.bf16 %v338
        %v603 = vunpack.c.h.bf16 %v338
        %v604 = vunpack.c.l.bf16 %v339
        %v605 = vunpack.c.h.bf16 %v339
        %v606 = vunpack.c.l.bf16 %v340
        %v607 = vunpack.c.h.bf16 %v340
        %v608 = vunpack.c.l.bf16 %v341
        %v609 = vunpack.c.h.bf16 %v341
        %v610 = vunpack.c.l.bf16 %v342
        %v611 = vunpack.c.h.bf16 %v342
        %v612 = vunpack.c.l.bf16 %v343
        %v613 = vunpack.c.h.bf16 %v343
        %v614 = vunpack.c.l.bf16 %v344
        %v615 = vunpack.c.h.bf16 %v344
        %v616 = vunpack.c.l.bf16 %v345
        %v617 = vunpack.c.h.bf16 %v345
        %v618 = vunpack.c.l.bf16 %v346
        %v619 = vunpack.c.h.bf16 %v346
        %v620 = vunpack.c.l.bf16 %v347
        %v621 = vunpack.c.h.bf16 %v347
        %v622 = vunpack.c.l.bf16 %v348
        %v623 = vunpack.c.h.bf16 %v348
        %v624 = vunpack.c.l.bf16 %v349
        %v625 = vunpack.c.h.bf16 %v349
        %v626 = vunpack.c.l.bf16 %v350
        %v627 = vunpack.c.h.bf16 %v350
        %v628 = vunpack.c.l.bf16 %v351
        %v629 = vunpack.c.h.bf16 %v351
        %v630 = vunpack.c.l.bf16 %v352
        %v631 = vunpack.c.h.bf16 %v352
        %v632 = vunpack.c.l.bf16 %v353
        %v633 = vunpack.c.h.bf16 %v353
        %v634 = vunpack.c.l.bf16 %v354
        %v635 = vunpack.c.h.bf16 %v354
        %v636 = vunpack.c.l.bf16 %v355
        %v637 = vunpack.c.h.bf16 %v355
        %v638 = vunpack.c.l.bf16 %v356
        %v639 = vunpack.c.h.bf16 %v356
        %v640 = vunpack.c.l.bf16 %v357
        %v641 = vunpack.c.h.bf16 %v357
        %v642 = vunpack.c.l.bf16 %v358
        %v643 = vunpack.c.h.bf16 %v358
        %v644 = vunpack.c.l.bf16 %v359
        %v645 = vunpack.c.h.bf16 %v359
        %v646 = vunpack.c.l.bf16 %v360
        %v647 = vunpack.c.h.bf16 %v360
        %v648 = vunpack.c.l.bf16 %v361
        %v649 = vunpack.c.h.bf16 %v361
        %v650 = vunpack.c.l.bf16 %v362
        %v651 = vunpack.c.h.bf16 %v362
        %v652 = vunpack.c.l.bf16 %v363
        %v653 = vunpack.c.h.bf16 %v363
        %v654 = vunpack.c.l.bf16 %v364
        %v655 = vunpack.c.h.bf16 %v364
        %v656 = vunpack.c.l.bf16 %v365
        %v657 = vunpack.c.h.bf16 %v365
        %v658 = vunpack.c.l.bf16 %v366
        %v659 = vunpack.c.h.bf16 %v366
        %v660 = vunpack.c.l.bf16 %v367
        %v661 = vunpack.c.h.bf16 %v367
        %v662 = vunpack.c.l.bf16 %v368
        %v663 = vunpack.c.h.bf16 %v368
        %v664 = vunpack.c.l.bf16 %v369
        %v665 = vunpack.c.h.bf16 %v369
        %v666 = vunpack.c.l.bf16 %v370
        %v667 = vunpack.c.h.bf16 %v370
        %v668 = vunpack.c.l.bf16 %v371
        %v669 = vunpack.c.h.bf16 %v371
        %v670 = vunpack.c.l.bf16 %v372
        %v671 = vunpack.c.h.bf16 %v372
        %v672 = vunpack.c.l.bf16 %v373
        %v673 = vunpack.c.h.bf16 %v373
        %v674 = vunpack.c.l.bf16 %v374
        %v675 = vunpack.c.h.bf16 %v374
        %v676 = vunpack.c.l.bf16 %v375
        %v677 = vunpack.c.h.bf16 %v375
        %v678 = vunpack.c.l.bf16 %v376
        %v679 = vunpack.c.h.bf16 %v376
        %v680 = vunpack.c.l.bf16 %v377
        %v681 = vunpack.c.h.bf16 %v377
        %v682 = vunpack.c.l.bf16 %v378
        %v683 = vunpack.c.h.bf16 %v378
        %v684 = vunpack.c.l.bf16 %v379
        %v685 = vunpack.c.h.bf16 %v379
        %v686 = vunpack.c.l.bf16 %v380
        %v687 = vunpack.c.h.bf16 %v380
        %v688 = vunpack.c.l.bf16 %v381
        %v689 = vunpack.c.h.bf16 %v381
        %v690 = vunpack.c.l.bf16 %v382
        %v691 = vunpack.c.h.bf16 %v382
        %v692 = vunpack.c.l.bf16 %v383
        %v693 = vunpack.c.h.bf16 %v383
        %v694 = vunpack.c.l.bf16 %v384
        %v695 = vunpack.c.h.bf16 %v384
        %v696 = vunpack.c.l.bf16 %v385
        %v697 = vunpack.c.h.bf16 %v385
        %v698 = vunpack.c.l.bf16 %v386
        %v699 = vunpack.c.h.bf16 %v386
        %v700 = vunpack.c.l.bf16 %v387
        %v701 = vunpack.c.h.bf16 %v387
        %v702 = vunpack.c.l.bf16 %v388
        %v703 = vunpack.c.h.bf16 %v388
        %v704 = vunpack.c.l.bf16 %v389
        %v705 = vunpack.c.h.bf16 %v389
        %v706 = vunpack.c.l.bf16 %v390
        %v707 = vunpack.c.h.bf16 %v390
        %v708 = vunpack.c.l.bf16 %v391
        %v709 = vunpack.c.h.bf16 %v391
        %v710 = vunpack.c.l.bf16 %v392
        %v711 = vunpack.c.h.bf16 %v392
        %v712 = vunpack.c.l.bf16 %v393
        %v713 = vunpack.c.h.bf16 %v393
        %v714 = vunpack.c.l.bf16 %v394
        %v715 = vunpack.c.h.bf16 %v394
        %v716 = vunpack.c.l.bf16 %v395
        %v717 = vunpack.c.h.bf16 %v395
        %v718 = vunpack.c.l.bf16 %v396
        %v719 = vunpack.c.h.bf16 %v396
        %v720 = vunpack.c.l.bf16 %v397
        %v721 = vunpack.c.h.bf16 %v397
        %v722 = vunpack.c.l.bf16 %v398
        %v723 = vunpack.c.h.bf16 %v398
        %v724 = vunpack.c.l.bf16 %v399
        %v725 = vunpack.c.h.bf16 %v399
        %v726 = vunpack.c.l.bf16 %v400
        %v727 = vunpack.c.h.bf16 %v400
        %v728 = vunpack.c.l.bf16 %v401
        %v729 = vunpack.c.h.bf16 %v401
        %v730 = vunpack.c.l.bf16 %v402
        %v731 = vunpack.c.h.bf16 %v402
        %v732 = vunpack.c.l.bf16 %v403
        %v733 = vunpack.c.h.bf16 %v403
        %v734 = vunpack.c.l.bf16 %v404
        %v735 = vunpack.c.h.bf16 %v404
        %v736 = vunpack.c.l.bf16 %v405
        %v737 = vunpack.c.h.bf16 %v405
        %v738 = vunpack.c.l.bf16 %v406
        %v739 = vunpack.c.h.bf16 %v406
        %v740 = vunpack.c.l.bf16 %v407
        %v741 = vunpack.c.h.bf16 %v407
        %v742 = vunpack.c.l.bf16 %v408
        %v743 = vunpack.c.h.bf16 %v408
        %v744 = vunpack.c.l.bf16 %v409
        %v745 = vunpack.c.h.bf16 %v409
        %v746 = vunpack.c.l.bf16 %v410
        %v747 = vunpack.c.h.bf16 %v410
        %v748 = vunpack.c.l.bf16 %v411
        %v749 = vunpack.c.h.bf16 %v411
        %v750 = vunpack.c.l.bf16 %v412
        %v751 = vunpack.c.h.bf16 %v412
        %v752 = vunpack.c.l.bf16 %v413
        %v753 = vunpack.c.h.bf16 %v413
        %v754 = vunpack.c.l.bf16 %v414
        %v755 = vunpack.c.h.bf16 %v414
        %v756 = vunpack.c.l.bf16 %v415
        %v757 = vunpack.c.h.bf16 %v415
        %v758 = vunpack.c.l.bf16 %v416
        %v759 = vunpack.c.h.bf16 %v416
        %v760 = vunpack.c.l.bf16 %v417
        %v761 = vunpack.c.h.bf16 %v417
        %v762 = vunpack.c.l.bf16 %v418
        %v763 = vunpack.c.h.bf16 %v418
        %v764 = vunpack.c.l.bf16 %v419
        %v765 = vunpack.c.h.bf16 %v419
        %v766 = vunpack.c.l.bf16 %v420
        %v767 = vunpack.c.h.bf16 %v420
        %v768 = vunpack.c.l.bf16 %v421
        %v769 = vunpack.c.h.bf16 %v421
        %v770 = vunpack.c.l.bf16 %v422
        %v771 = vunpack.c.h.bf16 %v422
        %v772 = vunpack.c.l.bf16 %v423
        %v773 = vunpack.c.h.bf16 %v423
        %v774 = vunpack.c.l.bf16 %v424
        %v775 = vunpack.c.h.bf16 %v424
        %v776 = vunpack.c.l.bf16 %v425
        %v777 = vunpack.c.h.bf16 %v425
        %v778 = vunpack.c.l.bf16 %v426
        %v779 = vunpack.c.h.bf16 %v426
        %v780 = vunpack.c.l.bf16 %v427
        %v781 = vunpack.c.h.bf16 %v427
        %v782 = vunpack.c.l.bf16 %v428
        %v783 = vunpack.c.h.bf16 %v428
        %v784 = vunpack.c.l.bf16 %v429
        %v785 = vunpack.c.h.bf16 %v429
        %v786 = vunpack.c.l.bf16 %v430
        %v787 = vunpack.c.h.bf16 %v430
        %v788 = vunpack.c.l.bf16 %v431
        %v789 = vunpack.c.h.bf16 %v431
        %v790 = vunpack.c.l.bf16 %v432
        %v791 = vunpack.c.h.bf16 %v432
        %v792 = vunpack.c.l.bf16 %v433
        %v793 = vunpack.c.h.bf16 %v433
        %v794 = vunpack.c.l.bf16 %v434
        %v795 = vunpack.c.h.bf16 %v434
        %v796 = vunpack.c.l.bf16 %v435
        %v797 = vunpack.c.h.bf16 %v435
        %v798 = vunpack.c.l.bf16 %v436
        %v799 = vunpack.c.h.bf16 %v436
        %v800 = vunpack.c.l.bf16 %v437
        %v801 = vunpack.c.h.bf16 %v437
        %v802 = vunpack.c.l.bf16 %v438
        %v803 = vunpack.c.h.bf16 %v438
        %v804 = vunpack.c.l.bf16 %v439
        %v805 = vunpack.c.h.bf16 %v439
        %v806 = vunpack.c.l.bf16 %v440
        %v807 = vunpack.c.h.bf16 %v440
        %v808 = vunpack.c.l.bf16 %v441
        %v809 = vunpack.c.h.bf16 %v441
        %v810 = vunpack.c.l.bf16 %v442
        %v811 = vunpack.c.h.bf16 %v442
        %v812 = vunpack.c.l.bf16 %v443
        %v813 = vunpack.c.h.bf16 %v443
        %v814 = vunpack.c.l.bf16 %v444
        %v815 = vunpack.c.h.bf16 %v444
        %v816 = vunpack.c.l.bf16 %v445
        %v817 = vunpack.c.h.bf16 %v445
        %v818 = vunpack.c.l.bf16 %v446
        %v819 = vunpack.c.h.bf16 %v446
        %v820 = vunpack.c.l.bf16 %v447
        %v821 = vunpack.c.h.bf16 %v447
        %v822 = vunpack.c.l.bf16 %v448
        %v823 = vunpack.c.h.bf16 %v448
        %v824 = vunpack.c.l.bf16 %v449
        %v825 = vunpack.c.h.bf16 %v449
        %v826 = vunpack.c.l.bf16 %v450
        %v827 = vunpack.c.h.bf16 %v450
        %v828 = vunpack.c.l.bf16 %v451
        %v829 = vunpack.c.h.bf16 %v451
        %v830 = vunpack.c.l.bf16 %v452
        %v831 = vunpack.c.h.bf16 %v452
        %v832 = vunpack.c.l.bf16 %v453
        %v833 = vunpack.c.h.bf16 %v453
        %v834 = vunpack.c.l.bf16 %v454
        %v835 = vunpack.c.h.bf16 %v454
        %v836 = vunpack.c.l.bf16 %v455
        %v837 = vunpack.c.h.bf16 %v455
        %v838 = vunpack.c.l.bf16 %v456
        %v839 = vunpack.c.h.bf16 %v456
        %v840 = vunpack.c.l.bf16 %v457
        %v841 = vunpack.c.h.bf16 %v457
        %v842 = vunpack.c.l.bf16 %v458
        %v843 = vunpack.c.h.bf16 %v458
        %v844 = vunpack.c.l.bf16 %v459
        %v845 = vunpack.c.h.bf16 %v459
        %v846 = vunpack.c.l.bf16 %v460
        %v847 = vunpack.c.h.bf16 %v460
        %v848 = vunpack.c.l.bf16 %v461
        %v849 = vunpack.c.h.bf16 %v461
        %v850 = vunpack.c.l.bf16 %v462
        %v851 = vunpack.c.h.bf16 %v462
        %v852 = vunpack.c.l.bf16 %v463
        %v853 = vunpack.c.h.bf16 %v463
        %v854 = vunpack.c.l.bf16 %v464
        %v855 = vunpack.c.h.bf16 %v464
        %v856 = vunpack.c.l.bf16 %v465
        %v857 = vunpack.c.h.bf16 %v465
        %v858 = vunpack.c.l.bf16 %v466
        %v859 = vunpack.c.h.bf16 %v466
        %v860 = vunpack.c.l.bf16 %v467
        %v861 = vunpack.c.h.bf16 %v467
        %v862 = vunpack.c.l.bf16 %v468
        %v863 = vunpack.c.h.bf16 %v468
        %v864 = vunpack.c.l.bf16 %v469
        %v865 = vunpack.c.h.bf16 %v469
        %v866 = vunpack.c.l.bf16 %v470
        %v867 = vunpack.c.h.bf16 %v470
        %v868 = vunpack.c.l.bf16 %v471
        %v869 = vunpack.c.h.bf16 %v471
        %v870 = vunpack.c.l.bf16 %v472
        %v871 = vunpack.c.h.bf16 %v472
        %v872 = vunpack.c.l.bf16 %v473
        %v873 = vunpack.c.h.bf16 %v473
        %v874 = vunpack.c.l.bf16 %v474
        %v875 = vunpack.c.h.bf16 %v474
        %v876 = vunpack.c.l.bf16 %v475
        %v877 = vunpack.c.h.bf16 %v475
        %v878 = vunpack.c.l.bf16 %v476
        %v879 = vunpack.c.h.bf16 %v476
        %v880 = vunpack.c.l.bf16 %v477
        %v881 = vunpack.c.h.bf16 %v477
        %v882 = vunpack.c.l.bf16 %v478
        %v883 = vunpack.c.h.bf16 %v478
        %v884 = vunpack.c.l.bf16 %v479
        %v885 = vunpack.c.h.bf16 %v479
        %v886 = vunpack.c.l.bf16 %v480
        %v887 = vunpack.c.h.bf16 %v480
        %v888 = vunpack.c.l.bf16 %v481
        %v889 = vunpack.c.h.bf16 %v481
        %v890 = vunpack.c.l.bf16 %v482
        %v891 = vunpack.c.h.bf16 %v482
        %v892 = vunpack.c.l.bf16 %v483
        %v893 = vunpack.c.h.bf16 %v483
        %v894 = vunpack.c.l.bf16 %v484
        %v895 = vunpack.c.h.bf16 %v484
        %v896 = vunpack.c.l.bf16 %v485
        %v897 = vunpack.c.h.bf16 %v485
        %v898 = vunpack.c.l.bf16 %v486
        %v899 = vunpack.c.h.bf16 %v486
        %v900 = vunpack.c.l.bf16 %v487
        %v901 = vunpack.c.h.bf16 %v487
        %v902 = vunpack.c.l.bf16 %v488
        %v903 = vunpack.c.h.bf16 %v488
        %v904 = vunpack.c.l.bf16 %v489
        %v905 = vunpack.c.h.bf16 %v489
        %v906 = vunpack.c.l.bf16 %v490
        %v907 = vunpack.c.h.bf16 %v490
        %v908 = vunpack.c.l.bf16 %v491
        %v909 = vunpack.c.h.bf16 %v491
        %v910 = vunpack.c.l.bf16 %v492
        %v911 = vunpack.c.h.bf16 %v492
        %v912 = vunpack.c.l.bf16 %v493
        %v913 = vunpack.c.h.bf16 %v493
        %v914 = vunpack.c.l.bf16 %v494
        %v915 = vunpack.c.h.bf16 %v494
        %v916 = vunpack.c.l.bf16 %v495
        %v917 = vunpack.c.h.bf16 %v495
        %v918 = vunpack.c.l.bf16 %v496
        %v919 = vunpack.c.h.bf16 %v496
        %v920 = vunpack.c.l.bf16 %v497
        %v921 = vunpack.c.h.bf16 %v497
        %v922 = vunpack.c.l.bf16 %v498
        %v923 = vunpack.c.h.bf16 %v498
        %v924 = vunpack.c.l.bf16 %v499
        %v925 = vunpack.c.h.bf16 %v499
        %v926 = vunpack.c.l.bf16 %v500
        %v927 = vunpack.c.h.bf16 %v500
        %v928 = vunpack.c.l.bf16 %v501
        %v929 = vunpack.c.h.bf16 %v501
        %v930 = vunpack.c.l.bf16 %v502
        %v931 = vunpack.c.h.bf16 %v502
        %v932 = vunpack.c.l.bf16 %v503
        %v933 = vunpack.c.h.bf16 %v503
        %v934 = vunpack.c.l.bf16 %v504
        %v935 = vunpack.c.h.bf16 %v504
        %v936 = vunpack.c.l.bf16 %v505
        %v937 = vunpack.c.h.bf16 %v505
        %v938 = vunpack.c.l.bf16 %v506
        %v939 = vunpack.c.h.bf16 %v506
        %v940 = vunpack.c.l.bf16 %v507
        %v941 = vunpack.c.h.bf16 %v507
        %v942 = vunpack.c.l.bf16 %v508
        %v943 = vunpack.c.h.bf16 %v508
        %v944 = vunpack.c.l.bf16 %v509
        %v945 = vunpack.c.h.bf16 %v509
        %v946 = vunpack.c.l.bf16 %v510
        %v947 = vunpack.c.h.bf16 %v510
        %v948 = vunpack.c.l.bf16 %v511
        %v949 = vunpack.c.h.bf16 %v511
        %v950 = vunpack.c.l.bf16 %v512
        %v951 = vunpack.c.h.bf16 %v512
        %v952 = vunpack.c.l.bf16 %v513
        %v953 = vunpack.c.h.bf16 %v513
        %v954 = vunpack.c.l.bf16 %v514
        %v955 = vunpack.c.h.bf16 %v514
        %v956 = vunpack.c.l.bf16 %v515
        %v957 = vunpack.c.h.bf16 %v515
        %v958 = vunpack.c.l.bf16 %v516
        %v959 = vunpack.c.h.bf16 %v516
        %v960 = vunpack.c.l.bf16 %v517
        %v961 = vunpack.c.h.bf16 %v517
        %v962 = vunpack.c.l.bf16 %v518
        %v963 = vunpack.c.h.bf16 %v518
        %v964 = vunpack.c.l.bf16 %v519
        %v965 = vunpack.c.h.bf16 %v519
        %v966 = vunpack.c.l.bf16 %v520
        %v967 = vunpack.c.h.bf16 %v520
        %v968 = vunpack.c.l.bf16 %v521
        %v969 = vunpack.c.h.bf16 %v521
        %v970 = vunpack.c.l.bf16 %v522
        %v971 = vunpack.c.h.bf16 %v522
        %v972 = vunpack.c.l.bf16 %v523
        %v973 = vunpack.c.h.bf16 %v523
        %v974 = vunpack.c.l.bf16 %v524
        %v975 = vunpack.c.h.bf16 %v524
        %v976 = vunpack.c.l.bf16 %v525
        %v977 = vunpack.c.h.bf16 %v525
        %v978 = vunpack.c.l.bf16 %v526
        %v979 = vunpack.c.h.bf16 %v526
        %v980 = vunpack.c.l.bf16 %v527
        %v981 = vunpack.c.h.bf16 %v527
        %v982 = vunpack.c.l.bf16 %v528
        %v983 = vunpack.c.h.bf16 %v528
        %v984 = vunpack.c.l.bf16 %v529
        %v985 = vunpack.c.h.bf16 %v529
        %v986 = vunpack.c.l.bf16 %v530
        %v987 = vunpack.c.h.bf16 %v530
        %v988 = vunpack.c.l.bf16 %v531
        %v989 = vunpack.c.h.bf16 %v531
        %v990 = vunpack.c.l.bf16 %v532
        %v991 = vunpack.c.h.bf16 %v532
        %v992 = vunpack.c.l.bf16 %v533
        %v993 = vunpack.c.h.bf16 %v533
        %v994 = vunpack.c.l.bf16 %v534
        %v995 = vunpack.c.h.bf16 %v534
        %v996 = vunpack.c.l.bf16 %v535
        %v997 = vunpack.c.h.bf16 %v535
        %v998 = vunpack.c.l.bf16 %v536
        %v999 = vunpack.c.h.bf16 %v536
        %v1000 = vunpack.c.l.bf16 %v537
        %v1001 = vunpack.c.h.bf16 %v537
        %v1002 = vunpack.c.l.bf16 %v538
        %v1003 = vunpack.c.h.bf16 %v538
        %v1004 = vunpack.c.l.bf16 %v539
        %v1005 = vunpack.c.h.bf16 %v539
        %v1006 = vunpack.c.l.bf16 %v540
        %v1007 = vunpack.c.h.bf16 %v540
        %v1008 = vunpack.c.l.bf16 %v541
        %v1009 = vunpack.c.h.bf16 %v541
        %v1010 = vunpack.c.l.bf16 %v542
        %v1011 = vunpack.c.h.bf16 %v542
        %v1012 = vunpack.c.l.bf16 %v543
        %v1013 = vunpack.c.h.bf16 %v543
        %v1014 = vunpack.c.l.bf16 %v544
        %v1015 = vunpack.c.h.bf16 %v544
        %v1016 = vunpack.c.l.bf16 %v545
        %v1017 = vunpack.c.h.bf16 %v545
        %v1018 = vunpack.c.l.bf16 %v546
        %v1019 = vunpack.c.h.bf16 %v546
        %v1020 = vunpack.c.l.bf16 %v547
        %v1021 = vunpack.c.h.bf16 %v547
        %v1022 = vunpack.c.l.bf16 %v548
        %v1023 = vunpack.c.h.bf16 %v548
        %v1024 = vunpack.c.l.bf16 %v549
        %v1025 = vunpack.c.h.bf16 %v549
        %v1026 = vunpack.c.l.bf16 %v550
        %v1027 = vunpack.c.h.bf16 %v550
        %v1028 = vunpack.c.l.bf16 %v551
        %v1029 = vunpack.c.h.bf16 %v551
        %v1030 = vunpack.c.l.bf16 %v552
        %v1031 = vunpack.c.h.bf16 %v552
        %v1032 = vunpack.c.l.bf16 %v553
        %v1033 = vunpack.c.h.bf16 %v553
        %v1034 = vunpack.c.l.bf16 %v554
        %v1035 = vunpack.c.h.bf16 %v554
        %v1036 = vunpack.c.l.bf16 %v555
        %v1037 = vunpack.c.h.bf16 %v555
        %v1038 = vunpack.c.l.bf16 %v556
        %v1039 = vunpack.c.h.bf16 %v556
        %v1040 = vunpack.c.l.bf16 %v557
        %v1041 = vunpack.c.h.bf16 %v557
        %v1042 = vunpack.c.l.bf16 %v558
        %v1043 = vunpack.c.h.bf16 %v558
        %v1044 = vunpack.c.l.bf16 %v559
        %v1045 = vunpack.c.h.bf16 %v559
        %v1046 = vunpack.c.l.bf16 %v560
        %v1047 = vunpack.c.h.bf16 %v560
        %v1048 = vunpack.c.l.bf16 %v561
        %v1049 = vunpack.c.h.bf16 %v561
        %v1050 = vunpack.c.l.bf16 %v562
        %v1051 = vunpack.c.h.bf16 %v562
        %v1052 = vunpack.c.l.bf16 %v563
        %v1053 = vunpack.c.h.bf16 %v563
        %v1054 = vunpack.c.l.bf16 %v564
        %v1055 = vunpack.c.h.bf16 %v564
        %v1056 = vunpack.c.l.bf16 %v565
        %v1057 = vunpack.c.h.bf16 %v565
        %v1058 = vunpack.c.l.bf16 %v566
        %v1059 = vunpack.c.h.bf16 %v566
        %v1060 = vunpack.c.l.bf16 %v567
        %v1061 = vunpack.c.h.bf16 %v567
        %v1062 = vunpack.c.l.bf16 %v568
        %v1063 = vunpack.c.h.bf16 %v568
        %v1064 = vunpack.c.l.bf16 %v569
        %v1065 = vunpack.c.h.bf16 %v569
        %v1066 = vunpack.c.l.bf16 %v570
        %v1067 = vunpack.c.h.bf16 %v570
        %v1068 = vunpack.c.l.bf16 %v571
        %v1069 = vunpack.c.h.bf16 %v571
        %v1070 = vunpack.c.l.bf16 %v572
        %v1071 = vunpack.c.h.bf16 %v572
        %v1072 = vunpack.c.l.bf16 %v573
        %v1073 = vunpack.c.h.bf16 %v573
        %v1074 = vunpack.c.l.bf16 %v574
        %v1075 = vunpack.c.h.bf16 %v574
        %v1076 = vunpack.c.l.bf16 %v575
        %v1077 = vunpack.c.h.bf16 %v575
        %v1078 = vunpack.c.l.bf16 %v576
        %v1079 = vunpack.c.h.bf16 %v576
        %v1080 = vunpack.c.l.bf16 %v577
        %v1081 = vunpack.c.h.bf16 %v577
        %v1082 = vunpack.c.l.bf16 %v578
        %v1083 = vunpack.c.h.bf16 %v578
        %v1084 = vunpack.c.l.bf16 %v579
        %v1085 = vunpack.c.h.bf16 %v579
        %v1086 = vunpack.c.l.bf16 %v580
        %v1087 = vunpack.c.h.bf16 %v580
        %v1088 = vunpack.c.l.bf16 %v581
        %v1089 = vunpack.c.h.bf16 %v581
        %v1090 = vunpack.c.l.bf16 %v582
        %v1091 = vunpack.c.h.bf16 %v582
        %v1092 = vunpack.c.l.bf16 %v583
        %v1093 = vunpack.c.h.bf16 %v583
        %v1094 = vunpack.c.l.bf16 %v584
        %v1095 = vunpack.c.h.bf16 %v584
        %v1096 = vunpack.c.l.bf16 %v585
        %v1097 = vunpack.c.h.bf16 %v585
        %v1098 = vadd.f32 %v586, %v588
        %v1099 = vadd.f32 %v1098, %v590
        %v1100 = vadd.f32 %v1099, %v592
        %v1101 = vadd.f32 %v1100, %v594
        %v1102 = vadd.f32 %v1101, %v596
        %v1103 = vadd.f32 %v1102, %v598
        %v1104 = vadd.f32 %v1103, %v600
        %v1105 = vadd.f32 %v1104, %v602
        %v1106 = vadd.f32 %v1105, %v604
        %v1107 = vadd.f32 %v1106, %v606
        %v1108 = vadd.f32 %v1107, %v608
        %v1109 = vadd.f32 %v1108, %v610
        %v1110 = vadd.f32 %v1109, %v612
        %v1111 = vadd.f32 %v1110, %v614
        %v1112 = vadd.f32 %v1111, %v616
        %v1113 = vadd.f32 %v1112, %v618
        %v1114 = vadd.f32 %v1113, %v620
        %v1115 = vadd.f32 %v1114, %v622
        %v1116 = vadd.f32 %v1115, %v624
        %v1117 = vadd.f32 %v1116, %v626
        %v1118 = vadd.f32 %v1117, %v628
        %v1119 = vadd.f32 %v1118, %v630
        %v1120 = vadd.f32 %v1119, %v632
        %v1121 = vadd.f32 %v1120, %v634
        %v1122 = vadd.f32 %v1121, %v636
        %v1123 = vadd.f32 %v1122, %v638
        %v1124 = vadd.f32 %v1123, %v640
        %v1125 = vadd.f32 %v1124, %v642
        %v1126 = vadd.f32 %v1125, %v644
        %v1127 = vadd.f32 %v1126, %v646
        %v1128 = vadd.f32 %v1127, %v648
        %v1129 = vrot.slane %v1128, 4
        %v1130 = vadd.f32 %v1128, %v1129
        %v1131 = vrot.slane %v1130, 2
        %v1132 = vadd.f32 %v1130, %v1131
        %v1133 = vrot.slane %v1132, 1
        %v1134 = vadd.f32 %v1132, %v1133
        %v1135 = vadd.f32 %v587, %v589
        %v1136 = vadd.f32 %v1135, %v591
        %v1137 = vadd.f32 %v1136, %v593
        %v1138 = vadd.f32 %v1137, %v595
        %v1139 = vadd.f32 %v1138, %v597
        %v1140 = vadd.f32 %v1139, %v599
        %v1141 = vadd.f32 %v1140, %v601
        %v1142 = vadd.f32 %v1141, %v603
        %v1143 = vadd.f32 %v1142, %v605
        %v1144 = vadd.f32 %v1143, %v607
        %v1145 = vadd.f32 %v1144, %v609
        %v1146 = vadd.f32 %v1145, %v611
        %v1147 = vadd.f32 %v1146, %v613
        %v1148 = vadd.f32 %v1147, %v615
        %v1149 = vadd.f32 %v1148, %v617
        %v1150 = vadd.f32 %v1149, %v619
        %v1151 = vadd.f32 %v1150, %v621
        %v1152 = vadd.f32 %v1151, %v623
        %v1153 = vadd.f32 %v1152, %v625
        %v1154 = vadd.f32 %v1153, %v627
        %v1155 = vadd.f32 %v1154, %v629
        %v1156 = vadd.f32 %v1155, %v631
        %v1157 = vadd.f32 %v1156, %v633
        %v1158 = vadd.f32 %v1157, %v635
        %v1159 = vadd.f32 %v1158, %v637
        %v1160 = vadd.f32 %v1159, %v639
        %v1161 = vadd.f32 %v1160, %v641
        %v1162 = vadd.f32 %v1161, %v643
        %v1163 = vadd.f32 %v1162, %v645
        %v1164 = vadd.f32 %v1163, %v647
        %v1165 = vadd.f32 %v1164, %v649
        %v1166 = vrot.slane %v1165, 4
        %v1167 = vadd.f32 %v1165, %v1166
        %v1168 = vrot.slane %v1167, 2
        %v1169 = vadd.f32 %v1167, %v1168
        %v1170 = vrot.slane %v1169, 1
        %v1171 = vadd.f32 %v1169, %v1170
        %v1172 = vadd.f32 %v650, %v652
        %v1173 = vadd.f32 %v1172, %v654
        %v1174 = vadd.f32 %v1173, %v656
        %v1175 = vadd.f32 %v1174, %v658
        %v1176 = vadd.f32 %v1175, %v660
        %v1177 = vadd.f32 %v1176, %v662
        %v1178 = vadd.f32 %v1177, %v664
        %v1179 = vadd.f32 %v1178, %v666
        %v1180 = vadd.f32 %v1179, %v668
        %v1181 = vadd.f32 %v1180, %v670
        %v1182 = vadd.f32 %v1181, %v672
        %v1183 = vadd.f32 %v1182, %v674
        %v1184 = vadd.f32 %v1183, %v676
        %v1185 = vadd.f32 %v1184, %v678
        %v1186 = vadd.f32 %v1185, %v680
        %v1187 = vadd.f32 %v1186, %v682
        %v1188 = vadd.f32 %v1187, %v684
        %v1189 = vadd.f32 %v1188, %v686
        %v1190 = vadd.f32 %v1189, %v688
        %v1191 = vadd.f32 %v1190, %v690
        %v1192 = vadd.f32 %v1191, %v692
        %v1193 = vadd.f32 %v1192, %v694
        %v1194 = vadd.f32 %v1193, %v696
        %v1195 = vadd.f32 %v1194, %v698
        %v1196 = vadd.f32 %v1195, %v700
        %v1197 = vadd.f32 %v1196, %v702
        %v1198 = vadd.f32 %v1197, %v704
        %v1199 = vadd.f32 %v1198, %v706
        %v1200 = vadd.f32 %v1199, %v708
        %v1201 = vadd.f32 %v1200, %v710
        %v1202 = vadd.f32 %v1201, %v712
        %v1203 = vrot.slane %v1202, 4
        %v1204 = vadd.f32 %v1202, %v1203
        %v1205 = vrot.slane %v1204, 2
        %v1206 = vadd.f32 %v1204, %v1205
        %v1207 = vrot.slane %v1206, 1
        %v1208 = vadd.f32 %v1206, %v1207
        %v1209 = vadd.f32 %v651, %v653
        %v1210 = vadd.f32 %v1209, %v655
        %v1211 = vadd.f32 %v1210, %v657
        %v1212 = vadd.f32 %v1211, %v659
        %v1213 = vadd.f32 %v1212, %v661
        %v1214 = vadd.f32 %v1213, %v663
        %v1215 = vadd.f32 %v1214, %v665
        %v1216 = vadd.f32 %v1215, %v667
        %v1217 = vadd.f32 %v1216, %v669
        %v1218 = vadd.f32 %v1217, %v671
        %v1219 = vadd.f32 %v1218, %v673
        %v1220 = vadd.f32 %v1219, %v675
        %v1221 = vadd.f32 %v1220, %v677
        %v1222 = vadd.f32 %v1221, %v679
        %v1223 = vadd.f32 %v1222, %v681
        %v1224 = vadd.f32 %v1223, %v683
        %v1225 = vadd.f32 %v1224, %v685
        %v1226 = vadd.f32 %v1225, %v687
        %v1227 = vadd.f32 %v1226, %v689
        %v1228 = vadd.f32 %v1227, %v691
        %v1229 = vadd.f32 %v1228, %v693
        %v1230 = vadd.f32 %v1229, %v695
        %v1231 = vadd.f32 %v1230, %v697
        %v1232 = vadd.f32 %v1231, %v699
        %v1233 = vadd.f32 %v1232, %v701
        %v1234 = vadd.f32 %v1233, %v703
        %v1235 = vadd.f32 %v1234, %v705
        %v1236 = vadd.f32 %v1235, %v707
        %v1237 = vadd.f32 %v1236, %v709
        %v1238 = vadd.f32 %v1237, %v711
        %v1239 = vadd.f32 %v1238, %v713
        %v1240 = vrot.slane %v1239, 4
        %v1241 = vadd.f32 %v1239, %v1240
        %v1242 = vrot.slane %v1241, 2
        %v1243 = vadd.f32 %v1241, %v1242
        %v1244 = vrot.slane %v1243, 1
        %v1245 = vadd.f32 %v1243, %v1244
        %v1246 = vadd.f32 %v714, %v716
        %v1247 = vadd.f32 %v1246, %v718
        %v1248 = vadd.f32 %v1247, %v720
        %v1249 = vadd.f32 %v1248, %v722
        %v1250 = vadd.f32 %v1249, %v724
        %v1251 = vadd.f32 %v1250, %v726
        %v1252 = vadd.f32 %v1251, %v728
        %v1253 = vadd.f32 %v1252, %v730
        %v1254 = vadd.f32 %v1253, %v732
        %v1255 = vadd.f32 %v1254, %v734
        %v1256 = vadd.f32 %v1255, %v736
        %v1257 = vadd.f32 %v1256, %v738
        %v1258 = vadd.f32 %v1257, %v740
        %v1259 = vadd.f32 %v1258, %v742
        %v1260 = vadd.f32 %v1259, %v744
        %v1261 = vadd.f32 %v1260, %v746
        %v1262 = vadd.f32 %v1261, %v748
        %v1263 = vadd.f32 %v1262, %v750
        %v1264 = vadd.f32 %v1263, %v752
        %v1265 = vadd.f32 %v1264, %v754
        %v1266 = vadd.f32 %v1265, %v756
        %v1267 = vadd.f32 %v1266, %v758
        %v1268 = vadd.f32 %v1267, %v760
        %v1269 = vadd.f32 %v1268, %v762
        %v1270 = vadd.f32 %v1269, %v764
        %v1271 = vadd.f32 %v1270, %v766
        %v1272 = vadd.f32 %v1271, %v768
        %v1273 = vadd.f32 %v1272, %v770
        %v1274 = vadd.f32 %v1273, %v772
        %v1275 = vadd.f32 %v1274, %v774
        %v1276 = vadd.f32 %v1275, %v776
        %v1277 = vrot.slane %v1276, 4
        %v1278 = vadd.f32 %v1276, %v1277
        %v1279 = vrot.slane %v1278, 2
        %v1280 = vadd.f32 %v1278, %v1279
        %v1281 = vrot.slane %v1280, 1
        %v1282 = vadd.f32 %v1280, %v1281
        %v1283 = vadd.f32 %v715, %v717
        %v1284 = vadd.f32 %v1283, %v719
        %v1285 = vadd.f32 %v1284, %v721
        %v1286 = vadd.f32 %v1285, %v723
        %v1287 = vadd.f32 %v1286, %v725
        %v1288 = vadd.f32 %v1287, %v727
        %v1289 = vadd.f32 %v1288, %v729
        %v1290 = vadd.f32 %v1289, %v731
        %v1291 = vadd.f32 %v1290, %v733
        %v1292 = vadd.f32 %v1291, %v735
        %v1293 = vadd.f32 %v1292, %v737
        %v1294 = vadd.f32 %v1293, %v739
        %v1295 = vadd.f32 %v1294, %v741
        %v1296 = vadd.f32 %v1295, %v743
        %v1297 = vadd.f32 %v1296, %v745
        %v1298 = vadd.f32 %v1297, %v747
        %v1299 = vadd.f32 %v1298, %v749
        %v1300 = vadd.f32 %v1299, %v751
        %v1301 = vadd.f32 %v1300, %v753
        %v1302 = vadd.f32 %v1301, %v755
        %v1303 = vadd.f32 %v1302, %v757
        %v1304 = vadd.f32 %v1303, %v759
        %v1305 = vadd.f32 %v1304, %v761
        %v1306 = vadd.f32 %v1305, %v763
        %v1307 = vadd.f32 %v1306, %v765
        %v1308 = vadd.f32 %v1307, %v767
        %v1309 = vadd.f32 %v1308, %v769
        %v1310 = vadd.f32 %v1309, %v771
        %v1311 = vadd.f32 %v1310, %v773
        %v1312 = vadd.f32 %v1311, %v775
        %v1313 = vadd.f32 %v1312, %v777
        %v1314 = vrot.slane %v1313, 4
        %v1315 = vadd.f32 %v1313, %v1314
        %v1316 = vrot.slane %v1315, 2
        %v1317 = vadd.f32 %v1315, %v1316
        %v1318 = vrot.slane %v1317, 1
        %v1319 = vadd.f32 %v1317, %v1318
        %v1320 = vadd.f32 %v778, %v780
        %v1321 = vadd.f32 %v1320, %v782
        %v1322 = vadd.f32 %v1321, %v784
        %v1323 = vadd.f32 %v1322, %v786
        %v1324 = vadd.f32 %v1323, %v788
        %v1325 = vadd.f32 %v1324, %v790
        %v1326 = vadd.f32 %v1325, %v792
        %v1327 = vadd.f32 %v1326, %v794
        %v1328 = vadd.f32 %v1327, %v796
        %v1329 = vadd.f32 %v1328, %v798
        %v1330 = vadd.f32 %v1329, %v800
        %v1331 = vadd.f32 %v1330, %v802
        %v1332 = vadd.f32 %v1331, %v804
        %v1333 = vadd.f32 %v1332, %v806
        %v1334 = vadd.f32 %v1333, %v808
        %v1335 = vadd.f32 %v1334, %v810
        %v1336 = vadd.f32 %v1335, %v812
        %v1337 = vadd.f32 %v1336, %v814
        %v1338 = vadd.f32 %v1337, %v816
        %v1339 = vadd.f32 %v1338, %v818
        %v1340 = vadd.f32 %v1339, %v820
        %v1341 = vadd.f32 %v1340, %v822
        %v1342 = vadd.f32 %v1341, %v824
        %v1343 = vadd.f32 %v1342, %v826
        %v1344 = vadd.f32 %v1343, %v828
        %v1345 = vadd.f32 %v1344, %v830
        %v1346 = vadd.f32 %v1345, %v832
        %v1347 = vadd.f32 %v1346, %v834
        %v1348 = vadd.f32 %v1347, %v836
        %v1349 = vadd.f32 %v1348, %v838
        %v1350 = vadd.f32 %v1349, %v840
        %v1351 = vrot.slane %v1350, 4
        %v1352 = vadd.f32 %v1350, %v1351
        %v1353 = vrot.slane %v1352, 2
        %v1354 = vadd.f32 %v1352, %v1353
        %v1355 = vrot.slane %v1354, 1
        %v1356 = vadd.f32 %v1354, %v1355
        %v1357 = vadd.f32 %v779, %v781
        %v1358 = vadd.f32 %v1357, %v783
        %v1359 = vadd.f32 %v1358, %v785
        %v1360 = vadd.f32 %v1359, %v787
        %v1361 = vadd.f32 %v1360, %v789
        %v1362 = vadd.f32 %v1361, %v791
        %v1363 = vadd.f32 %v1362, %v793
        %v1364 = vadd.f32 %v1363, %v795
        %v1365 = vadd.f32 %v1364, %v797
        %v1366 = vadd.f32 %v1365, %v799
        %v1367 = vadd.f32 %v1366, %v801
        %v1368 = vadd.f32 %v1367, %v803
        %v1369 = vadd.f32 %v1368, %v805
        %v1370 = vadd.f32 %v1369, %v807
        %v1371 = vadd.f32 %v1370, %v809
        %v1372 = vadd.f32 %v1371, %v811
        %v1373 = vadd.f32 %v1372, %v813
        %v1374 = vadd.f32 %v1373, %v815
        %v1375 = vadd.f32 %v1374, %v817
        %v1376 = vadd.f32 %v1375, %v819
        %v1377 = vadd.f32 %v1376, %v821
        %v1378 = vadd.f32 %v1377, %v823
        %v1379 = vadd.f32 %v1378, %v825
        %v1380 = vadd.f32 %v1379, %v827
        %v1381 = vadd.f32 %v1380, %v829
        %v1382 = vadd.f32 %v1381, %v831
        %v1383 = vadd.f32 %v1382, %v833
        %v1384 = vadd.f32 %v1383, %v835
        %v1385 = vadd.f32 %v1384, %v837
        %v1386 = vadd.f32 %v1385, %v839
        %v1387 = vadd.f32 %v1386, %v841
        %v1388 = vrot.slane %v1387, 4
        %v1389 = vadd.f32 %v1387, %v1388
        %v1390 = vrot.slane %v1389, 2
        %v1391 = vadd.f32 %v1389, %v1390
        %v1392 = vrot.slane %v1391, 1
        %v1393 = vadd.f32 %v1391, %v1392
        %v1394 = vadd.f32 %v842, %v844
        %v1395 = vadd.f32 %v1394, %v846
        %v1396 = vadd.f32 %v1395, %v848
        %v1397 = vadd.f32 %v1396, %v850
        %v1398 = vadd.f32 %v1397, %v852
        %v1399 = vadd.f32 %v1398, %v854
        %v1400 = vadd.f32 %v1399, %v856
        %v1401 = vadd.f32 %v1400, %v858
        %v1402 = vadd.f32 %v1401, %v860
        %v1403 = vadd.f32 %v1402, %v862
        %v1404 = vadd.f32 %v1403, %v864
        %v1405 = vadd.f32 %v1404, %v866
        %v1406 = vadd.f32 %v1405, %v868
        %v1407 = vadd.f32 %v1406, %v870
        %v1408 = vadd.f32 %v1407, %v872
        %v1409 = vadd.f32 %v1408, %v874
        %v1410 = vadd.f32 %v1409, %v876
        %v1411 = vadd.f32 %v1410, %v878
        %v1412 = vadd.f32 %v1411, %v880
        %v1413 = vadd.f32 %v1412, %v882
        %v1414 = vadd.f32 %v1413, %v884
        %v1415 = vadd.f32 %v1414, %v886
        %v1416 = vadd.f32 %v1415, %v888
        %v1417 = vadd.f32 %v1416, %v890
        %v1418 = vadd.f32 %v1417, %v892
        %v1419 = vadd.f32 %v1418, %v894
        %v1420 = vadd.f32 %v1419, %v896
        %v1421 = vadd.f32 %v1420, %v898
        %v1422 = vadd.f32 %v1421, %v900
        %v1423 = vadd.f32 %v1422, %v902
        %v1424 = vadd.f32 %v1423, %v904
        %v1425 = vrot.slane %v1424, 4
        %v1426 = vadd.f32 %v1424, %v1425
        %v1427 = vrot.slane %v1426, 2
        %v1428 = vadd.f32 %v1426, %v1427
        %v1429 = vrot.slane %v1428, 1
        %v1430 = vadd.f32 %v1428, %v1429
        %v1431 = vadd.f32 %v843, %v845
        %v1432 = vadd.f32 %v1431, %v847
        %v1433 = vadd.f32 %v1432, %v849
        %v1434 = vadd.f32 %v1433, %v851
        %v1435 = vadd.f32 %v1434, %v853
        %v1436 = vadd.f32 %v1435, %v855
        %v1437 = vadd.f32 %v1436, %v857
        %v1438 = vadd.f32 %v1437, %v859
        %v1439 = vadd.f32 %v1438, %v861
        %v1440 = vadd.f32 %v1439, %v863
        %v1441 = vadd.f32 %v1440, %v865
        %v1442 = vadd.f32 %v1441, %v867
        %v1443 = vadd.f32 %v1442, %v869
        %v1444 = vadd.f32 %v1443, %v871
        %v1445 = vadd.f32 %v1444, %v873
        %v1446 = vadd.f32 %v1445, %v875
        %v1447 = vadd.f32 %v1446, %v877
        %v1448 = vadd.f32 %v1447, %v879
        %v1449 = vadd.f32 %v1448, %v881
        %v1450 = vadd.f32 %v1449, %v883
        %v1451 = vadd.f32 %v1450, %v885
        %v1452 = vadd.f32 %v1451, %v887
        %v1453 = vadd.f32 %v1452, %v889
        %v1454 = vadd.f32 %v1453, %v891
        %v1455 = vadd.f32 %v1454, %v893
        %v1456 = vadd.f32 %v1455, %v895
        %v1457 = vadd.f32 %v1456, %v897
        %v1458 = vadd.f32 %v1457, %v899
        %v1459 = vadd.f32 %v1458, %v901
        %v1460 = vadd.f32 %v1459, %v903
        %v1461 = vadd.f32 %v1460, %v905
        %v1462 = vrot.slane %v1461, 4
        %v1463 = vadd.f32 %v1461, %v1462
        %v1464 = vrot.slane %v1463, 2
        %v1465 = vadd.f32 %v1463, %v1464
        %v1466 = vrot.slane %v1465, 1
        %v1467 = vadd.f32 %v1465, %v1466
        %v1468 = vadd.f32 %v906, %v908
        %v1469 = vadd.f32 %v1468, %v910
        %v1470 = vadd.f32 %v1469, %v912
        %v1471 = vadd.f32 %v1470, %v914
        %v1472 = vadd.f32 %v1471, %v916
        %v1473 = vadd.f32 %v1472, %v918
        %v1474 = vadd.f32 %v1473, %v920
        %v1475 = vadd.f32 %v1474, %v922
        %v1476 = vadd.f32 %v1475, %v924
        %v1477 = vadd.f32 %v1476, %v926
        %v1478 = vadd.f32 %v1477, %v928
        %v1479 = vadd.f32 %v1478, %v930
        %v1480 = vadd.f32 %v1479, %v932
        %v1481 = vadd.f32 %v1480, %v934
        %v1482 = vadd.f32 %v1481, %v936
        %v1483 = vadd.f32 %v1482, %v938
        %v1484 = vadd.f32 %v1483, %v940
        %v1485 = vadd.f32 %v1484, %v942
        %v1486 = vadd.f32 %v1485, %v944
        %v1487 = vadd.f32 %v1486, %v946
        %v1488 = vadd.f32 %v1487, %v948
        %v1489 = vadd.f32 %v1488, %v950
        %v1490 = vadd.f32 %v1489, %v952
        %v1491 = vadd.f32 %v1490, %v954
        %v1492 = vadd.f32 %v1491, %v956
        %v1493 = vadd.f32 %v1492, %v958
        %v1494 = vadd.f32 %v1493, %v960
        %v1495 = vadd.f32 %v1494, %v962
        %v1496 = vadd.f32 %v1495, %v964
        %v1497 = vadd.f32 %v1496, %v966
        %v1498 = vadd.f32 %v1497, %v968
        %v1499 = vrot.slane %v1498, 4
        %v1500 = vadd.f32 %v1498, %v1499
        %v1501 = vrot.slane %v1500, 2
        %v1502 = vadd.f32 %v1500, %v1501
        %v1503 = vrot.slane %v1502, 1
        %v1504 = vadd.f32 %v1502, %v1503
        %v1505 = vadd.f32 %v907, %v909
        %v1506 = vadd.f32 %v1505, %v911
        %v1507 = vadd.f32 %v1506, %v913
        %v1508 = vadd.f32 %v1507, %v915
        %v1509 = vadd.f32 %v1508, %v917
        %v1510 = vadd.f32 %v1509, %v919
        %v1511 = vadd.f32 %v1510, %v921
        %v1512 = vadd.f32 %v1511, %v923
        %v1513 = vadd.f32 %v1512, %v925
        %v1514 = vadd.f32 %v1513, %v927
        %v1515 = vadd.f32 %v1514, %v929
        %v1516 = vadd.f32 %v1515, %v931
        %v1517 = vadd.f32 %v1516, %v933
        %v1518 = vadd.f32 %v1517, %v935
        %v1519 = vadd.f32 %v1518, %v937
        %v1520 = vadd.f32 %v1519, %v939
        %v1521 = vadd.f32 %v1520, %v941
        %v1522 = vadd.f32 %v1521, %v943
        %v1523 = vadd.f32 %v1522, %v945
        %v1524 = vadd.f32 %v1523, %v947
        %v1525 = vadd.f32 %v1524, %v949
        %v1526 = vadd.f32 %v1525, %v951
        %v1527 = vadd.f32 %v1526, %v953
        %v1528 = vadd.f32 %v1527, %v955
        %v1529 = vadd.f32 %v1528, %v957
        %v1530 = vadd.f32 %v1529, %v959
        %v1531 = vadd.f32 %v1530, %v961
        %v1532 = vadd.f32 %v1531, %v963
        %v1533 = vadd.f32 %v1532, %v965
        %v1534 = vadd.f32 %v1533, %v967
        %v1535 = vadd.f32 %v1534, %v969
        %v1536 = vrot.slane %v1535, 4
        %v1537 = vadd.f32 %v1535, %v1536
        %v1538 = vrot.slane %v1537, 2
        %v1539 = vadd.f32 %v1537, %v1538
        %v1540 = vrot.slane %v1539, 1
        %v1541 = vadd.f32 %v1539, %v1540
        %v1542 = vadd.f32 %v970, %v972
        %v1543 = vadd.f32 %v1542, %v974
        %v1544 = vadd.f32 %v1543, %v976
        %v1545 = vadd.f32 %v1544, %v978
        %v1546 = vadd.f32 %v1545, %v980
        %v1547 = vadd.f32 %v1546, %v982
        %v1548 = vadd.f32 %v1547, %v984
        %v1549 = vadd.f32 %v1548, %v986
        %v1550 = vadd.f32 %v1549, %v988
        %v1551 = vadd.f32 %v1550, %v990
        %v1552 = vadd.f32 %v1551, %v992
        %v1553 = vadd.f32 %v1552, %v994
        %v1554 = vadd.f32 %v1553, %v996
        %v1555 = vadd.f32 %v1554, %v998
        %v1556 = vadd.f32 %v1555, %v1000
        %v1557 = vadd.f32 %v1556, %v1002
        %v1558 = vadd.f32 %v1557, %v1004
        %v1559 = vadd.f32 %v1558, %v1006
        %v1560 = vadd.f32 %v1559, %v1008
        %v1561 = vadd.f32 %v1560, %v1010
        %v1562 = vadd.f32 %v1561, %v1012
        %v1563 = vadd.f32 %v1562, %v1014
        %v1564 = vadd.f32 %v1563, %v1016
        %v1565 = vadd.f32 %v1564, %v1018
        %v1566 = vadd.f32 %v1565, %v1020
        %v1567 = vadd.f32 %v1566, %v1022
        %v1568 = vadd.f32 %v1567, %v1024
        %v1569 = vadd.f32 %v1568, %v1026
        %v1570 = vadd.f32 %v1569, %v1028
        %v1571 = vadd.f32 %v1570, %v1030
        %v1572 = vadd.f32 %v1571, %v1032
        %v1573 = vrot.slane %v1572, 4
        %v1574 = vadd.f32 %v1572, %v1573
        %v1575 = vrot.slane %v1574, 2
        %v1576 = vadd.f32 %v1574, %v1575
        %v1577 = vrot.slane %v1576, 1
        %v1578 = vadd.f32 %v1576, %v1577
        %v1579 = vadd.f32 %v971, %v973
        %v1580 = vadd.f32 %v1579, %v975
        %v1581 = vadd.f32 %v1580, %v977
        %v1582 = vadd.f32 %v1581, %v979
        %v1583 = vadd.f32 %v1582, %v981
        %v1584 = vadd.f32 %v1583, %v983
        %v1585 = vadd.f32 %v1584, %v985
        %v1586 = vadd.f32 %v1585, %v987
        %v1587 = vadd.f32 %v1586, %v989
        %v1588 = vadd.f32 %v1587, %v991
        %v1589 = vadd.f32 %v1588, %v993
        %v1590 = vadd.f32 %v1589, %v995
        %v1591 = vadd.f32 %v1590, %v997
        %v1592 = vadd.f32 %v1591, %v999
        %v1593 = vadd.f32 %v1592, %v1001
        %v1594 = vadd.f32 %v1593, %v1003
        %v1595 = vadd.f32 %v1594, %v1005
        %v1596 = vadd.f32 %v1595, %v1007
        %v1597 = vadd.f32 %v1596, %v1009
        %v1598 = vadd.f32 %v1597, %v1011
        %v1599 = vadd.f32 %v1598, %v1013
        %v1600 = vadd.f32 %v1599, %v1015
        %v1601 = vadd.f32 %v1600, %v1017
        %v1602 = vadd.f32 %v1601, %v1019
        %v1603 = vadd.f32 %v1602, %v1021
        %v1604 = vadd.f32 %v1603, %v1023
        %v1605 = vadd.f32 %v1604, %v1025
        %v1606 = vadd.f32 %v1605, %v1027
        %v1607 = vadd.f32 %v1606, %v1029
        %v1608 = vadd.f32 %v1607, %v1031
        %v1609 = vadd.f32 %v1608, %v1033
        %v1610 = vrot.slane %v1609, 4
        %v1611 = vadd.f32 %v1609, %v1610
        %v1612 = vrot.slane %v1611, 2
        %v1613 = vadd.f32 %v1611, %v1612
        %v1614 = vrot.slane %v1613, 1
        %v1615 = vadd.f32 %v1613, %v1614
        %v1616 = vadd.f32 %v1034, %v1036
        %v1617 = vadd.f32 %v1616, %v1038
        %v1618 = vadd.f32 %v1617, %v1040
        %v1619 = vadd.f32 %v1618, %v1042
        %v1620 = vadd.f32 %v1619, %v1044
        %v1621 = vadd.f32 %v1620, %v1046
        %v1622 = vadd.f32 %v1621, %v1048
        %v1623 = vadd.f32 %v1622, %v1050
        %v1624 = vadd.f32 %v1623, %v1052
        %v1625 = vadd.f32 %v1624, %v1054
        %v1626 = vadd.f32 %v1625, %v1056
        %v1627 = vadd.f32 %v1626, %v1058
        %v1628 = vadd.f32 %v1627, %v1060
        %v1629 = vadd.f32 %v1628, %v1062
        %v1630 = vadd.f32 %v1629, %v1064
        %v1631 = vadd.f32 %v1630, %v1066
        %v1632 = vadd.f32 %v1631, %v1068
        %v1633 = vadd.f32 %v1632, %v1070
        %v1634 = vadd.f32 %v1633, %v1072
        %v1635 = vadd.f32 %v1634, %v1074
        %v1636 = vadd.f32 %v1635, %v1076
        %v1637 = vadd.f32 %v1636, %v1078
        %v1638 = vadd.f32 %v1637, %v1080
        %v1639 = vadd.f32 %v1638, %v1082
        %v1640 = vadd.f32 %v1639, %v1084
        %v1641 = vadd.f32 %v1640, %v1086
        %v1642 = vadd.f32 %v1641, %v1088
        %v1643 = vadd.f32 %v1642, %v1090
        %v1644 = vadd.f32 %v1643, %v1092
        %v1645 = vadd.f32 %v1644, %v1094
        %v1646 = vadd.f32 %v1645, %v1096
        %v1647 = vrot.slane %v1646, 4
        %v1648 = vadd.f32 %v1646, %v1647
        %v1649 = vrot.slane %v1648, 2
        %v1650 = vadd.f32 %v1648, %v1649
        %v1651 = vrot.slane %v1650, 1
        %v1652 = vadd.f32 %v1650, %v1651
        %v1653 = vadd.f32 %v1035, %v1037
        %v1654 = vadd.f32 %v1653, %v1039
        %v1655 = vadd.f32 %v1654, %v1041
        %v1656 = vadd.f32 %v1655, %v1043
        %v1657 = vadd.f32 %v1656, %v1045
        %v1658 = vadd.f32 %v1657, %v1047
        %v1659 = vadd.f32 %v1658, %v1049
        %v1660 = vadd.f32 %v1659, %v1051
        %v1661 = vadd.f32 %v1660, %v1053
        %v1662 = vadd.f32 %v1661, %v1055
        %v1663 = vadd.f32 %v1662, %v1057
        %v1664 = vadd.f32 %v1663, %v1059
        %v1665 = vadd.f32 %v1664, %v1061
        %v1666 = vadd.f32 %v1665, %v1063
        %v1667 = vadd.f32 %v1666, %v1065
        %v1668 = vadd.f32 %v1667, %v1067
        %v1669 = vadd.f32 %v1668, %v1069
        %v1670 = vadd.f32 %v1669, %v1071
        %v1671 = vadd.f32 %v1670, %v1073
        %v1672 = vadd.f32 %v1671, %v1075
        %v1673 = vadd.f32 %v1672, %v1077
        %v1674 = vadd.f32 %v1673, %v1079
        %v1675 = vadd.f32 %v1674, %v1081
        %v1676 = vadd.f32 %v1675, %v1083
        %v1677 = vadd.f32 %v1676, %v1085
        %v1678 = vadd.f32 %v1677, %v1087
        %v1679 = vadd.f32 %v1678, %v1089
        %v1680 = vadd.f32 %v1679, %v1091
        %v1681 = vadd.f32 %v1680, %v1093
        %v1682 = vadd.f32 %v1681, %v1095
        %v1683 = vadd.f32 %v1682, %v1097
        %v1684 = vrot.slane %v1683, 4
        %v1685 = vadd.f32 %v1683, %v1684
        %v1686 = vrot.slane %v1685, 2
        %v1687 = vadd.f32 %v1685, %v1686
        %v1688 = vrot.slane %v1687, 1
        %v1689 = vadd.f32 %v1687, %v1688
        %vm1706 = vcmask 1041409
        %v1707 = vsel %vm1706, %v1208, %v1134
        %vm1708 = vcmask 1042434
        %v1709 = vsel %vm1708, %v1282, %v1707
        %vm1710 = vcmask 1043459
        %v1711 = vsel %vm1710, %v1356, %v1709
        %vm1712 = vcmask 1044484
        %v1713 = vsel %vm1712, %v1430, %v1711
        %vm1714 = vcmask 1045509
        %v1715 = vsel %vm1714, %v1504, %v1713
        %vm1716 = vcmask 1046534
        %v1717 = vsel %vm1716, %v1578, %v1715
        %vm1718 = vcmask 1047559
        %v1719 = vsel %vm1718, %v1652, %v1717
        %v1720 = vsel %vm1706, %v1245, %v1171
        %v1721 = vsel %vm1708, %v1319, %v1720
        %v1722 = vsel %vm1710, %v1393, %v1721
        %v1723 = vsel %vm1712, %v1467, %v1722
        %v1724 = vsel %vm1714, %v1541, %v1723
        %v1725 = vsel %vm1716, %v1615, %v1724
        %v1726 = vsel %vm1718, %v1689, %v1725
        %v1729 = vadd.f32 %v328, %v1719
        %v1730 = vadd.f32 %v329, %v1726
        %1731 = vst [vmem:[%s318 + $0x10] sm:$0xff] %v1729
        %1732 = vst [vmem:[%s318 + $0x18] sm:$0xff] %v1730
        // Predicated region
        $region65: #{matryoshka_forward.1} parent=39 // pred_check
          %p1733 = pneg %p320
        $region66: #{matryoshka_forward.1} parent=39 // pred_check_branch
          %1735 = sbr.rel (%p1733) target = $region68
        $region67: #{matryoshka_forward.1} parent=39 // pred_region
          %v1736 = vld [vmem:[%s318 + $0x10] sm:$0xff]
          %v1737 = vld [vmem:[%s318 + $0x18] sm:$0xff]
          %v1738 = vmul.f32 %v1736, 0.00390625
          %v1739 = vmul.f32 %v1737, 0.00390625
          %1740 = vst [vmem:[%s318 + $0x10] sm:$0xff] %v1738
          %1741 = vst [vmem:[%s318 + $0x18] sm:$0xff] %v1739
          %v1742 = vpack.c.bf16 %v1738, %v1738
          %v1743 = vpack.c.bf16 %v1739, %v1739
          %v1744 = vld [vmem:[#allocation4] sm:$0xff]
          %v1745 = vld [vmem:[#allocation4 + $0x8] sm:$0xf]
          %v1746 = vld [vmem:[#allocation4 + $0xc] sm:$0xff]
          %v1747 = vld [vmem:[#allocation4 + $0x14] sm:$0xf]
          %v1748 = vld [vmem:[#allocation4 + $0x18] sm:$0xff]
          %v1749 = vld [vmem:[#allocation4 + $0x20] sm:$0xf]
          %v1750 = vld [vmem:[#allocation4 + $0x24] sm:$0xff]
          %v1751 = vld [vmem:[#allocation4 + $0x2c] sm:$0xf]
          %v1752 = vld [vmem:[#allocation4 + $0x30] sm:$0xff]
          %v1753 = vld [vmem:[#allocation4 + $0x38] sm:$0xf]
          %v1754 = vld [vmem:[#allocation4 + $0x3c] sm:$0xff]
          %v1755 = vld [vmem:[#allocation4 + $0x44] sm:$0xf]
          %v1756 = vld [vmem:[#allocation4 + $0x48] sm:$0xff]
          %v1757 = vld [vmem:[#allocation4 + $0x50] sm:$0xf]
          %v1758 = vld [vmem:[#allocation4 + $0x54] sm:$0xff]
          %v1759 = vld [vmem:[#allocation4 + $0x5c] sm:$0xf]
          %v1760 = vld [vmem:[#allocation4 + $0x60] sm:$0xff]
          %v1761 = vld [vmem:[#allocation4 + $0x68] sm:$0xf]
          %v1762 = vld [vmem:[#allocation4 + $0x6c] sm:$0xff]
          %v1763 = vld [vmem:[#allocation4 + $0x74] sm:$0xf]
          %v1764 = vld [vmem:[#allocation4 + $0x78] sm:$0xff]
          %v1765 = vld [vmem:[#allocation4 + $0x80] sm:$0xf]
          %v1766 = vld [vmem:[#allocation4 + $0x84] sm:$0xff]
          %v1767 = vld [vmem:[#allocation4 + $0x8c] sm:$0xf]
          %v1768 = vld [vmem:[#allocation4 + $0x90] sm:$0xff]
          %v1769 = vld [vmem:[#allocation4 + $0x98] sm:$0xf]
          %v1770 = vld [vmem:[#allocation4 + $0x9c] sm:$0xff]
          %v1771 = vld [vmem:[#allocation4 + $0xa4] sm:$0xf]
          %v1772 = vld [vmem:[#allocation4 + $0xa8] sm:$0xff]
          %v1773 = vld [vmem:[#allocation4 + $0xb0] sm:$0xf]
          %v1774 = vld [vmem:[#allocation4 + $0xb4] sm:$0xff]
          %v1775 = vld [vmem:[#allocation4 + $0xbc] sm:$0xf]
          %v1776 = vld [vmem:[#allocation4 + $0xc0] sm:$0xff]
          %v1777 = vld [vmem:[#allocation4 + $0xc8] sm:$0xf]
          %v1778 = vld [vmem:[#allocation4 + $0xcc] sm:$0xff]
          %v1779 = vld [vmem:[#allocation4 + $0xd4] sm:$0xf]
          %v1780 = vld [vmem:[#allocation4 + $0xd8] sm:$0xff]
          %v1781 = vld [vmem:[#allocation4 + $0xe0] sm:$0xf]
          %v1782 = vld [vmem:[#allocation4 + $0xe4] sm:$0xff]
          %v1783 = vld [vmem:[#allocation4 + $0xec] sm:$0xf]
          %v1784 = vld [vmem:[#allocation4 + $0xf0] sm:$0xff]
          %v1785 = vld [vmem:[#allocation4 + $0xf8] sm:$0xf]
          %v1786 = vld [vmem:[#allocation4 + $0xfc] sm:$0xff]
          %v1787 = vld [vmem:[#allocation4 + $0x104] sm:$0xf]
          %v1788 = vld [vmem:[#allocation4 + $0x108] sm:$0xff]
          %v1789 = vld [vmem:[#allocation4 + $0x110] sm:$0xf]
          %v1790 = vld [vmem:[#allocation4 + $0x114] sm:$0xff]
          %v1791 = vld [vmem:[#allocation4 + $0x11c] sm:$0xf]
          %v1792 = vld [vmem:[#allocation4 + $0x120] sm:$0xff]
          %v1793 = vld [vmem:[#allocation4 + $0x128] sm:$0xf]
          %v1794 = vld [vmem:[#allocation4 + $0x12c] sm:$0xff]
          %v1795 = vld [vmem:[#allocation4 + $0x134] sm:$0xf]
          %v1796 = vld [vmem:[#allocation4 + $0x138] sm:$0xff]
          %v1797 = vld [vmem:[#allocation4 + $0x140] sm:$0xf]
          %v1798 = vld [vmem:[#allocation4 + $0x144] sm:$0xff]
          %v1799 = vld [vmem:[#allocation4 + $0x14c] sm:$0xf]
          %v1800 = vld [vmem:[#allocation4 + $0x150] sm:$0xff]
          %v1801 = vld [vmem:[#allocation4 + $0x158] sm:$0xf]
          %v1802 = vld [vmem:[#allocation4 + $0x15c] sm:$0xff]
          %v1803 = vld [vmem:[#allocation4 + $0x164] sm:$0xf]
          %v1804 = vld [vmem:[#allocation4 + $0x168] sm:$0xff]
          %v1805 = vld [vmem:[#allocation4 + $0x170] sm:$0xf]
          %v1806 = vld [vmem:[#allocation4 + $0x174] sm:$0xff]
          %v1807 = vld [vmem:[#allocation4 + $0x17c] sm:$0xf]
          %v1808 = vld [vmem:[#allocation6] sm:$0x7]
          %v1810 = vlaneseq
          %v1811 = vshrl.u32 %v1810, 7
          %v1812 = vsub.s32 0, %v1811
          %v1813 = vrot.slane %v1808, %v1812
          %v1814 = vlaneseq
          %v1815 = vshrl.u32 %v1814, 7
          %v1816 = vsub.s32 1, %v1815
          %v1817 = vrot.slane %v1808, %v1816
          %v1818 = vlaneseq
          %v1819 = vshrl.u32 %v1818, 7
          %v1820 = vsub.s32 2, %v1819
          %v1821 = vrot.slane %v1808, %v1820
          %v1889 = vunpack.c.l.b16 %v1744
          %v1890 = vunpack.c.h.b16 %v1744
          %v1891 = vunpack.c.l.b16 %v1745
          %v1892 = vunpack.c.l.b16 %v1746
          %v1893 = vunpack.c.h.b16 %v1746
          %v1894 = vunpack.c.l.b16 %v1747
          %v1895 = vunpack.c.l.b16 %v1748
          %v1896 = vunpack.c.h.b16 %v1748
          %v1897 = vunpack.c.l.b16 %v1749
          %v1898 = vunpack.c.l.b16 %v1750
          %v1899 = vunpack.c.h.b16 %v1750
          %v1900 = vunpack.c.l.b16 %v1751
          %v1901 = vunpack.c.l.b16 %v1752
          %v1902 = vunpack.c.h.b16 %v1752
          %v1903 = vunpack.c.l.b16 %v1753
          %v1904 = vunpack.c.l.b16 %v1754
          %v1905 = vunpack.c.h.b16 %v1754
          %v1906 = vunpack.c.l.b16 %v1755
          %v1907 = vunpack.c.l.b16 %v1756
          %v1908 = vunpack.c.h.b16 %v1756
          %v1909 = vunpack.c.l.b16 %v1757
          %v1910 = vunpack.c.l.b16 %v1758
          %v1911 = vunpack.c.h.b16 %v1758
          %v1912 = vunpack.c.l.b16 %v1759
          %v1913 = vunpack.c.l.b16 %v1760
          %v1914 = vunpack.c.h.b16 %v1760
          %v1915 = vunpack.c.l.b16 %v1761
          %v1916 = vunpack.c.l.b16 %v1762
          %v1917 = vunpack.c.h.b16 %v1762
          %v1918 = vunpack.c.l.b16 %v1763
          %v1919 = vunpack.c.l.b16 %v1764
          %v1920 = vunpack.c.h.b16 %v1764
          %v1921 = vunpack.c.l.b16 %v1765
          %v1922 = vunpack.c.l.b16 %v1766
          %v1923 = vunpack.c.h.b16 %v1766
          %v1924 = vunpack.c.l.b16 %v1767
          %v1925 = vunpack.c.l.b16 %v1768
          %v1926 = vunpack.c.h.b16 %v1768
          %v1927 = vunpack.c.l.b16 %v1769
          %v1928 = vunpack.c.l.b16 %v1770
          %v1929 = vunpack.c.h.b16 %v1770
          %v1930 = vunpack.c.l.b16 %v1771
          %v1931 = vunpack.c.l.b16 %v1772
          %v1932 = vunpack.c.h.b16 %v1772
          %v1933 = vunpack.c.l.b16 %v1773
          %v1934 = vunpack.c.l.b16 %v1774
          %v1935 = vunpack.c.h.b16 %v1774
          %v1936 = vunpack.c.l.b16 %v1775
          %v1937 = vunpack.c.l.b16 %v1776
          %v1938 = vunpack.c.h.b16 %v1776
          %v1939 = vunpack.c.l.b16 %v1777
          %v1940 = vunpack.c.l.b16 %v1778
          %v1941 = vunpack.c.h.b16 %v1778
          %v1942 = vunpack.c.l.b16 %v1779
          %v1943 = vunpack.c.l.b16 %v1780
          %v1944 = vunpack.c.h.b16 %v1780
          %v1945 = vunpack.c.l.b16 %v1781
          %v1946 = vunpack.c.l.b16 %v1782
          %v1947 = vunpack.c.h.b16 %v1782
          %v1948 = vunpack.c.l.b16 %v1783
          %v1949 = vunpack.c.l.b16 %v1784
          %v1950 = vunpack.c.h.b16 %v1784
          %v1951 = vunpack.c.l.b16 %v1785
          %v1952 = vunpack.c.l.b16 %v1786
          %v1953 = vunpack.c.h.b16 %v1786
          %v1954 = vunpack.c.l.b16 %v1787
          %v1955 = vunpack.c.l.b16 %v1788
          %v1956 = vunpack.c.h.b16 %v1788
          %v1957 = vunpack.c.l.b16 %v1789
          %v1958 = vunpack.c.l.b16 %v1790
          %v1959 = vunpack.c.h.b16 %v1790
          %v1960 = vunpack.c.l.b16 %v1791
          %v1961 = vunpack.c.l.b16 %v1792
          %v1962 = vunpack.c.h.b16 %v1792
          %v1963 = vunpack.c.l.b16 %v1793
          %v1964 = vunpack.c.l.b16 %v1794
          %v1965 = vunpack.c.h.b16 %v1794
          %v1966 = vunpack.c.l.b16 %v1795
          %v1967 = vunpack.c.l.b16 %v1796
          %v1968 = vunpack.c.h.b16 %v1796
          %v1969 = vunpack.c.l.b16 %v1797
          %v1970 = vunpack.c.l.b16 %v1798
          %v1971 = vunpack.c.h.b16 %v1798
          %v1972 = vunpack.c.l.b16 %v1799
          %v1973 = vunpack.c.l.b16 %v1800
          %v1974 = vunpack.c.h.b16 %v1800
          %v1975 = vunpack.c.l.b16 %v1801
          %v1976 = vunpack.c.l.b16 %v1802
          %v1977 = vunpack.c.h.b16 %v1802
          %v1978 = vunpack.c.l.b16 %v1803
          %v1979 = vunpack.c.l.b16 %v1804
          %v1980 = vunpack.c.h.b16 %v1804
          %v1981 = vunpack.c.l.b16 %v1805
          %v1982 = vunpack.c.l.b16 %v1806
          %v1983 = vunpack.c.h.b16 %v1806
          %v1984 = vunpack.c.l.b16 %v1807
          %v1985 = vpack.c.b16 %v1892, %v1889
          %v1986 = vpack.c.b16 %v1893, %v1890
          %v1987 = vpack.c.b16 %v1894, %v1891
          %v1988 = vpack.c.b16 %v1898, %v1895
          %v1989 = vpack.c.b16 %v1899, %v1896
          %v1990 = vpack.c.b16 %v1900, %v1897
          %v1991 = vpack.c.b16 %v1904, %v1901
          %v1992 = vpack.c.b16 %v1905, %v1902
          %v1993 = vpack.c.b16 %v1906, %v1903
          %v1994 = vpack.c.b16 %v1910, %v1907
          %v1995 = vpack.c.b16 %v1911, %v1908
          %v1996 = vpack.c.b16 %v1912, %v1909
          %v1997 = vpack.c.b16 %v1916, %v1913
          %v1998 = vpack.c.b16 %v1917, %v1914
          %v1999 = vpack.c.b16 %v1918, %v1915
          %v2000 = vpack.c.b16 %v1922, %v1919
          %v2001 = vpack.c.b16 %v1923, %v1920
          %v2002 = vpack.c.b16 %v1924, %v1921
          %v2003 = vpack.c.b16 %v1928, %v1925
          %v2004 = vpack.c.b16 %v1929, %v1926
          %v2005 = vpack.c.b16 %v1930, %v1927
          %v2006 = vpack.c.b16 %v1934, %v1931
          %v2007 = vpack.c.b16 %v1935, %v1932
          %v2008 = vpack.c.b16 %v1936, %v1933
          %v2009 = vpack.c.b16 %v1940, %v1937
          %v2010 = vpack.c.b16 %v1941, %v1938
          %v2011 = vpack.c.b16 %v1942, %v1939
          %v2012 = vpack.c.b16 %v1946, %v1943
          %v2013 = vpack.c.b16 %v1947, %v1944
          %v2014 = vpack.c.b16 %v1948, %v1945
          %v2015 = vpack.c.b16 %v1952, %v1949
          %v2016 = vpack.c.b16 %v1953, %v1950
          %v2017 = vpack.c.b16 %v1954, %v1951
          %v2018 = vpack.c.b16 %v1958, %v1955
          %v2019 = vpack.c.b16 %v1959, %v1956
          %v2020 = vpack.c.b16 %v1960, %v1957
          %v2021 = vpack.c.b16 %v1964, %v1961
          %v2022 = vpack.c.b16 %v1965, %v1962
          %v2023 = vpack.c.b16 %v1966, %v1963
          %v2024 = vpack.c.b16 %v1970, %v1967
          %v2025 = vpack.c.b16 %v1971, %v1968
          %v2026 = vpack.c.b16 %v1972, %v1969
          %v2027 = vpack.c.b16 %v1976, %v1973
          %v2028 = vpack.c.b16 %v1977, %v1974
          %v2029 = vpack.c.b16 %v1978, %v1975
          %v2030 = vpack.c.b16 %v1982, %v1979
          %v2031 = vpack.c.b16 %v1983, %v1980
          %v2032 = vpack.c.b16 %v1984, %v1981
          %2081 = vmatprep.subr.bf16.mxu0 %v1986
          %2082 = vmatpush1.bf16.msra.mxu0 %v1985
          %2083 = vmatprep.subr.bf16.mxu0 %v1989
          %2084 = vmatpush1.bf16.msra.mxu0 %v1988
          %2085 = vmatprep.subr.bf16.mxu0 %v1992
          %2086 = vmatpush1.bf16.msra.mxu0 %v1991
          %2087 = vmatprep.subr.bf16.mxu0 %v1995
          %2088 = vmatpush1.bf16.msra.mxu0 %v1994
          %2089 = vmatprep.subr.bf16.mxu0 %v1998
          %2090 = vmatpush1.bf16.msra.mxu0 %v1997
          %2091 = vmatprep.subr.bf16.mxu0 %v2001
          %2092 = vmatpush1.bf16.msra.mxu0 %v2000
          %2093 = vmatprep.subr.bf16.mxu0 %v2004
          %2094 = vmatpush1.bf16.msra.mxu0 %v2003
          %2095 = vmatprep.subr.bf16.mxu0 %v2007
          %2096 = vmatpush1.bf16.msra.mxu0 %v2006
          %2097 = vmatprep.subr.bf16.mxu0 %v2010
          %2098 = vmatpush1.bf16.msra.mxu0 %v2009
          %2099 = vmatprep.subr.bf16.mxu0 %v2013
          %2100 = vmatpush1.bf16.msra.mxu0 %v2012
          %2101 = vmatprep.subr.bf16.mxu0 %v2016
          %2102 = vmatpush1.bf16.msra.mxu0 %v2015
          %2103 = vmatprep.subr.bf16.mxu0 %v2019
          %2104 = vmatpush1.bf16.msra.mxu0 %v2018
          %2105 = vmatprep.subr.bf16.mxu0 %v2022
          %2106 = vmatpush1.bf16.msra.mxu0 %v2021
          %2107 = vmatprep.subr.bf16.mxu0 %v2025
          %2108 = vmatpush1.bf16.msra.mxu0 %v2024
          %2109 = vmatprep.subr.bf16.mxu0 %v2028
          %2110 = vmatpush1.bf16.msra.mxu0 %v2027
          %2111 = vmatprep.subr.bf16.mxu0 %v2031
          %2112 = vmatpush1.bf16.msra.mxu0 %v2030
          %2113 = vmatprep.mubr.bf16.mxu0 %v1743
          %2114 = vmatmul.mubr.bf16.gmra.mrb[0].mxu0 %v1742
          %v2115 = vpop.f32.mrb[0].mxu0
          %v2116 = vadd.f32 %v1813, %v2115
          %v2117 = vpop.f32.mrb[0].mxu0
          %v2118 = vadd.f32 %v1817, %v2117
          %v2119 = vpop.f32.mrb[0].mxu0
          %v2120 = vpop.f32.mrb[0].mxu0
          %2121 = vdwg.mxu0
          %2122 = vmatprep.subr.bf16.mxu0 0
          %2123 = vmatpush1.bf16.msra.mxu0 %v1987
          %2124 = vmatprep.subr.bf16.mxu0 0
          %2125 = vmatpush1.bf16.msra.mxu0 %v1990
          %2126 = vmatprep.subr.bf16.mxu0 0
          %2127 = vmatpush1.bf16.msra.mxu0 %v1993
          %2128 = vmatprep.subr.bf16.mxu0 0
          %2129 = vmatpush1.bf16.msra.mxu0 %v1996
          %2130 = vmatprep.subr.bf16.mxu0 0
          %2131 = vmatpush1.bf16.msra.mxu0 %v1999
          %2132 = vmatprep.subr.bf16.mxu0 0
          %2133 = vmatpush1.bf16.msra.mxu0 %v2002
          %2134 = vmatprep.subr.bf16.mxu0 0
          %2135 = vmatpush1.bf16.msra.mxu0 %v2005
          %2136 = vmatprep.subr.bf16.mxu0 0
          %2137 = vmatpush1.bf16.msra.mxu0 %v2008
          %2138 = vmatprep.subr.bf16.mxu0 0
          %2139 = vmatpush1.bf16.msra.mxu0 %v2011
          %2140 = vmatprep.subr.bf16.mxu0 0
          %2141 = vmatpush1.bf16.msra.mxu0 %v2014
          %2142 = vmatprep.subr.bf16.mxu0 0
          %2143 = vmatpush1.bf16.msra.mxu0 %v2017
          %2144 = vmatprep.subr.bf16.mxu0 0
          %2145 = vmatpush1.bf16.msra.mxu0 %v2020
          %2146 = vmatprep.subr.bf16.mxu0 0
          %2147 = vmatpush1.bf16.msra.mxu0 %v2023
          %2148 = vmatprep.subr.bf16.mxu0 0
          %2149 = vmatpush1.bf16.msra.mxu0 %v2026
          %2150 = vmatprep.subr.bf16.mxu0 0
          %2151 = vmatpush1.bf16.msra.mxu0 %v2029
          %2152 = vmatprep.subr.bf16.mxu0 0
          %2153 = vmatpush1.bf16.msra.mxu0 %v2032
          %2154 = vmatprep.mubr.bf16.mxu0 %v1743
          %2155 = vmatmul.mubr.bf16.gmra.mrb[0].mxu0 %v1742
          %v2156 = vpop.f32.mrb[0].mxu0
          %v2157 = vadd.f32 %v1821, %v2156
          %v2158 = vpop.f32.mrb[0].mxu0
          %v2159 = vpop.f32.mrb[0].mxu0
          %v2160 = vpop.f32.mrb[0].mxu0
          %2161 = vdwg.mxu0
          %v2162 = vmax.f32 %v2118, 0.0
          %v2163 = vmax.f32 %v2157, 0.0
          %v2164 = vpack.c.bf16 %v2162, %v2162
          %v2165 = vpack.c.bf16 %v2163, %v2163
          %v2166 = vld [vmem:[#allocation7] sm:$0xf]
          %v2167 = vld [vmem:[#allocation7 + $0x4] sm:$0xf]
          %v2168 = vld [vmem:[#allocation7 + $0x8] sm:$0xf]
          %v2169 = vld [vmem:[#allocation7 + $0xc] sm:$0xf]
          %v2170 = vld [vmem:[#allocation7 + $0x10] sm:$0xf]
          %v2171 = vld [vmem:[#allocation7 + $0x14] sm:$0xf]
          %v2172 = vld [vmem:[#allocation7 + $0x18] sm:$0xf]
          %v2173 = vld [vmem:[#allocation7 + $0x1c] sm:$0xf]
          %v2174 = vld [vmem:[#allocation7 + $0x20] sm:$0xf]
          %v2175 = vld [vmem:[#allocation7 + $0x24] sm:$0xf]
          %v2176 = vld [vmem:[#allocation7 + $0x28] sm:$0xf]
          %v2177 = vld [vmem:[#allocation7 + $0x2c] sm:$0xf]
          %v2178 = vld [vmem:[#allocation7 + $0x30] sm:$0xf]
          %v2179 = vld [vmem:[#allocation7 + $0x34] sm:$0xf]
          %v2180 = vld [vmem:[#allocation7 + $0x38] sm:$0xf]
          %v2181 = vld [vmem:[#allocation7 + $0x3c] sm:$0xf]
          %v2182 = vld [vmem:[#allocation7 + $0x40] sm:$0xf]
          %v2183 = vld [vmem:[#allocation7 + $0x44] sm:$0xf]
          %v2184 = vld [vmem:[#allocation7 + $0x48] sm:$0xf]
          %v2185 = vld [vmem:[#allocation7 + $0x4c] sm:$0xf]
          %v2186 = vld [vmem:[#allocation7 + $0x50] sm:$0xf]
          %v2187 = vld [vmem:[#allocation7 + $0x54] sm:$0xf]
          %v2188 = vld [vmem:[#allocation7 + $0x58] sm:$0xf]
          %v2189 = vld [vmem:[#allocation7 + $0x5c] sm:$0xf]
          %v2190 = vld [vmem:[#allocation7 + $0x60] sm:$0xf]
          %v2191 = vld [vmem:[#allocation7 + $0x64] sm:$0xf]
          %v2192 = vld [vmem:[#allocation7 + $0x68] sm:$0xf]
          %v2193 = vld [vmem:[#allocation7 + $0x6c] sm:$0xf]
          %v2194 = vld [vmem:[#allocation7 + $0x70] sm:$0xf]
          %v2195 = vld [vmem:[#allocation7 + $0x74] sm:$0xf]
          %v2196 = vld [vmem:[#allocation7 + $0x78] sm:$0xf]
          %v2197 = vld [vmem:[#allocation7 + $0x7c] sm:$0xf]
          %v2198 = vld [vmem:[#allocation9] sm:$0x1]
          %v2200 = vlaneseq
          %v2201 = vshrl.u32 %v2200, 7
          %v2202 = vsub.s32 0, %v2201
          %v2203 = vrot.slane %v2198, %v2202
          %v2237 = vunpack.c.l.b16 %v2166
          %v2238 = vunpack.c.l.b16 %v2167
          %v2239 = vunpack.c.l.b16 %v2168
          %v2240 = vunpack.c.l.b16 %v2169
          %v2241 = vunpack.c.l.b16 %v2170
          %v2242 = vunpack.c.l.b16 %v2171
          %v2243 = vunpack.c.l.b16 %v2172
          %v2244 = vunpack.c.l.b16 %v2173
          %v2245 = vunpack.c.l.b16 %v2174
          %v2246 = vunpack.c.l.b16 %v2175
          %v2247 = vunpack.c.l.b16 %v2176
          %v2248 = vunpack.c.l.b16 %v2177
          %v2249 = vunpack.c.l.b16 %v2178
          %v2250 = vunpack.c.l.b16 %v2179
          %v2251 = vunpack.c.l.b16 %v2180
          %v2252 = vunpack.c.l.b16 %v2181
          %v2253 = vunpack.c.l.b16 %v2182
          %v2254 = vunpack.c.l.b16 %v2183
          %v2255 = vunpack.c.l.b16 %v2184
          %v2256 = vunpack.c.l.b16 %v2185
          %v2257 = vunpack.c.l.b16 %v2186
          %v2258 = vunpack.c.l.b16 %v2187
          %v2259 = vunpack.c.l.b16 %v2188
          %v2260 = vunpack.c.l.b16 %v2189
          %v2261 = vunpack.c.l.b16 %v2190
          %v2262 = vunpack.c.l.b16 %v2191
          %v2263 = vunpack.c.l.b16 %v2192
          %v2264 = vunpack.c.l.b16 %v2193
          %v2265 = vunpack.c.l.b16 %v2194
          %v2266 = vunpack.c.l.b16 %v2195
          %v2267 = vunpack.c.l.b16 %v2196
          %v2268 = vunpack.c.l.b16 %v2197
          %v2269 = vpack.c.b16 %v2238, %v2237
          %v2270 = vpack.c.b16 %v2240, %v2239
          %v2271 = vpack.c.b16 %v2242, %v2241
          %v2272 = vpack.c.b16 %v2244, %v2243
          %v2273 = vpack.c.b16 %v2246, %v2245
          %v2274 = vpack.c.b16 %v2248, %v2247
          %v2275 = vpack.c.b16 %v2250, %v2249
          %v2276 = vpack.c.b16 %v2252, %v2251
          %v2277 = vpack.c.b16 %v2254, %v2253
          %v2278 = vpack.c.b16 %v2256, %v2255
          %v2279 = vpack.c.b16 %v2258, %v2257
          %v2280 = vpack.c.b16 %v2260, %v2259
          %v2281 = vpack.c.b16 %v2262, %v2261
          %v2282 = vpack.c.b16 %v2264, %v2263
          %v2283 = vpack.c.b16 %v2266, %v2265
          %v2284 = vpack.c.b16 %v2268, %v2267
          %2301 = vmatprep.subr.bf16.mxu0 0
          %2302 = vmatpush1.bf16.msra.mxu0 %v2269
          %2303 = vmatprep.subr.bf16.mxu0 0
          %2304 = vmatpush1.bf16.msra.mxu0 %v2270
          %2305 = vmatprep.subr.bf16.mxu0 0
          %2306 = vmatpush1.bf16.msra.mxu0 %v2271
          %2307 = vmatprep.subr.bf16.mxu0 0
          %2308 = vmatpush1.bf16.msra.mxu0 %v2272
          %2309 = vmatprep.subr.bf16.mxu0 0
          %2310 = vmatpush1.bf16.msra.mxu0 %v2273
          %2311 = vmatprep.subr.bf16.mxu0 0
          %2312 = vmatpush1.bf16.msra.mxu0 %v2274
          %2313 = vmatprep.subr.bf16.mxu0 0
          %2314 = vmatpush1.bf16.msra.mxu0 %v2275
          %2315 = vmatprep.subr.bf16.mxu0 0
          %2316 = vmatpush1.bf16.msra.mxu0 %v2276
          %2317 = vmatprep.subr.bf16.mxu0 0
          %2318 = vmatpush1.bf16.msra.mxu0 %v2277
          %2319 = vmatprep.subr.bf16.mxu0 0
          %2320 = vmatpush1.bf16.msra.mxu0 %v2278
          %2321 = vmatprep.subr.bf16.mxu0 0
          %2322 = vmatpush1.bf16.msra.mxu0 %v2279
          %2323 = vmatprep.subr.bf16.mxu0 0
          %2324 = vmatpush1.bf16.msra.mxu0 %v2280
          %2325 = vmatprep.subr.bf16.mxu0 0
          %2326 = vmatpush1.bf16.msra.mxu0 %v2281
          %2327 = vmatprep.subr.bf16.mxu0 0
          %2328 = vmatpush1.bf16.msra.mxu0 %v2282
          %2329 = vmatprep.subr.bf16.mxu0 0
          %2330 = vmatpush1.bf16.msra.mxu0 %v2283
          %2331 = vmatprep.subr.bf16.mxu0 0
          %2332 = vmatpush1.bf16.msra.mxu0 %v2284
          %2333 = vmatprep.mubr.bf16.mxu0 %v2165
          %2334 = vmatmul.mubr.bf16.gmra.mrb[0].mxu0 %v2164
          %v2335 = vpop.f32.mrb[0].mxu0
          %v2336 = vadd.f32 %v2203, %v2335
          %v2337 = vpop.f32.mrb[0].mxu0
          %v2338 = vpop.f32.mrb[0].mxu0
          %v2339 = vpop.f32.mrb[0].mxu0
          %2340 = vdwg.mxu0
          %2341 = vst [vmem:[%s318] sm:$0xff] %v2336
          %2342 = vst [vmem:[%s318 + $0x8] sm:$0xff] %v2116
        $region68: #{matryoshka_forward.1} parent=39 // pred_fallthru
          _
        %p2343 = scmp.lt.s32.totalorder %s25, 1
        %s2344 = scalar_select %p2343, %s25, 1
        %s2345 = smul.addr %s2344, 4
        %s2346 = smul.addr %s2345, 8
        %s2347 = scalar_lea.vmem %s5, %s2346
        // Predicated region
        $region69: #{matryoshka_forward.1} parent=39 // pred_check
          %p2348 = pneg %p163
        $region70: #{matryoshka_forward.1} parent=39 // pred_check_branch
          %2350 = sbr.rel (%p2348) target = $region72
        $region71: #{matryoshka_forward.1} parent=39 // pred_region
          _
        $region72: #{matryoshka_forward.1} parent=39 // pred_fallthru
          _
      $region40: #{matryoshka_forward.1} parent=5 // pred_fallthru
        _
      %p2351 = scmp.le.s32.totalorder 2, %s16
      // Predicated region
      $region73: #{matryoshka_forward.1} parent=5 // pred_check
        %p2352 = pneg %p2351
      $region74: #{matryoshka_forward.1} parent=5 // pred_check_branch
        %2354 = sbr.rel (%p2352) target = $region76
      $region75: #{matryoshka_forward.1} parent=5 // pred_region
        %s2355 = ssub.s32 %s16, 2
        // Predicated region
        $region77: #{matryoshka_forward.1} parent=75 // pred_check
          %p2356 = pneg %p169
        $region78: #{matryoshka_forward.1} parent=75 // pred_check_branch
          %2358 = sbr.rel (%p2356) target = $region80
        $region79: #{matryoshka_forward.1} parent=75 // pred_region
          %p2359 = scmp.lt.s32.totalorder %s27, 1
          %s2360 = scalar_select %p2359, %s27, 1
          %s2361 = smul.addr %s2360, 4
          %s2362 = smul.addr %s2361, 8
          %s2363 = scalar_lea.vmem %s5, %s2362
        $region80: #{matryoshka_forward.1} parent=75 // pred_fallthru
          _
      $region76: #{matryoshka_forward.1} parent=5 // pred_fallthru
        _
    $region6: #{matryoshka_forward.1} parent=1 // loop_footer
      %s20 = sadd.s32 1, %s16
    $region7: #{matryoshka_forward.1} parent=1 // loop_footer_branch
      %15 = sbr.rel target = $region3
    $region8: #{matryoshka_forward.1} parent=1 // loop_exit
      _
    %2364 = vsyncpa [#allocation3], 1
    %s2365 = scalar_lea.sflag [#allocation3], 1
    %2366 = vsyncpa %s2365, 1
    %2367 = vsyncpa [#allocation5], 1
    %2368 = vsyncpa [#allocation8], 1

</llo_original>
